<compile_context>
chip_gen: v7x
topology: tpu7x:2x2x1
jax: 0.10.0
libtpu: 0.0.40
codegen_flags: <defaults>
</compile_context>

<pallas_src>
import jax
import jax.numpy as jnp
from jax.experimental import pallas as pl
from jax.experimental.pallas import tpu as pltpu

NEG_SLOPE = 0.01  # torch.nn.LeakyReLU default negative_slope


def _leaky_relu(x):
    # max(x, 0.01*x) == LeakyReLU(x); 2 VALU ops
    return jnp.maximum(x, NEG_SLOPE * x)


def _act_dtype():
    """bf16 epilogues only where the VPU is bf16-capable (v6e / v7x)."""
    try:
        kind = jax.devices()[0].device_kind.lower()
    except Exception:
        return jnp.float32
    return jnp.bfloat16 if ("v6" in kind or "v7" in kind) else jnp.float32


def _make_kernel(num_layers, act_dtype):
    def kernel(x_ref, s_ref, st_ref, invlen_ref, entro_ref,
               w_up_ref, b_up_ref, w_down_ref, b_down_ref,
               wcp_ref, wcg_ref, out_ref):
        # x_ref      : (N, Dp)         f32    per-point features (zero-padded lanes)
        # s_ref      : (Gp, N)         bf16   exact 0/1 one-hot membership
        # st_ref     : (N, Gp)         bf16   one-hot transpose (gather operator)
        # invlen_ref : (Gp, 1)         f32    1/len (0 for padded groups)
        # entro_ref  : (Gp, 1)         f32    w * entro (scalar w folded in wrapper)
        # w_up_ref   : (2L+1, Dp, DMp) bf16   [w1p_0, w1g_0, ..., wo1]
        # b_up_ref   : (2L+1, DMp)     f32
        # w_down_ref : (2L+1, DMp, Dp) bf16   [w2p_0, w2g_0, ..., wo2(padded)]
        # b_down_ref : (3L+1, Dp)      f32    [b2p_0, b2g_0, bc_0, ..., bo2(padded)]
        # wcp_ref    : (L, Dp, Dp)     bf16   combine weight, point half
        # wcg_ref    : (L, Dp, Dp)     bf16   combine weight, group half
        f32 = jnp.float32
        bf16 = jnp.bfloat16

        x = x_ref[...].astype(act_dtype)        # (N, Dp)
        S = s_ref[...]                          # (Gp, N) bf16, exact 0/1
        ST = st_ref[...]                        # (N, Gp) bf16
        inv_len = invlen_ref[...]               # (Gp, 1) f32

        for l in range(num_layers):  # static unroll over pointNet blocks (L is small)
            # point_update: Linear -> LeakyReLU -> Dropout(id) -> Linear -> LeakyReLU -> Dropout(id)
            h = _leaky_relu(
                (jnp.dot(x.astype(bf16), w_up_ref[2 * l],
                         preferred_element_type=f32) + b_up_ref[2 * l]).astype(act_dtype))
            p = _leaky_relu(
                (jnp.dot(h.astype(bf16), w_down_ref[2 * l],
                         preferred_element_type=f32) + b_down_ref[3 * l]).astype(act_dtype))
            # segment_csr(p, all2seg, reduce="mean"): exact 0/1 bf16 one-hot dot
            # (single MXU pass) + f32 VPU rescale by 1/len.
            g = jnp.dot(S, p.astype(bf16), preferred_element_type=f32) * inv_len   # (Gp, Dp) f32
            # group_update MLP
            hg = _leaky_relu(
                (jnp.dot(g.astype(bf16), w_up_ref[2 * l + 1],
                         preferred_element_type=f32) + b_up_ref[2 * l + 1]).astype(act_dtype))
            gu = _leaky_relu(
                (jnp.dot(hg.astype(bf16), w_down_ref[2 * l + 1],
                         preferred_element_type=f32) + b_down_ref[3 * l + 1]).astype(act_dtype))
            # combine(cat([p, gu[seg2all]], 1)) reassociated (concat dropped):
            #   cat-matmul == p @ Wc_p + (gu @ Wc_g)[seg2all]
            # The group half is applied on Gp rows *before* the scatter back.
            gc = jnp.dot(gu.astype(bf16), wcg_ref[l], preferred_element_type=f32)   # (Gp, Dp)
            gc_pts = jnp.dot(ST, gc.astype(bf16), preferred_element_type=f32)       # (N, Dp)
            pc = jnp.dot(p.astype(bf16), wcp_ref[l], preferred_element_type=f32)    # (N, Dp)
            comb = _leaky_relu((pc + gc_pts + b_down_ref[3 * l + 2]).astype(act_dtype))
            x = comb + x

        # out_linear(segment_csr(out, all2seg, reduce="mean"))
        g = jnp.dot(S, x.astype(bf16), preferred_element_type=f32) * inv_len        # (Gp, Dp)
        h = _leaky_relu(
            (jnp.dot(g.astype(bf16), w_up_ref[2 * num_layers],
                     preferred_element_type=f32) + b_up_ref[2 * num_layers]).astype(act_dtype))
        o = _leaky_relu(
            (jnp.dot(h.astype(bf16), w_down_ref[2 * num_layers],
                     preferred_element_type=f32) + b_down_ref[3 * num_layers]).astype(act_dtype))
        # out.squeeze() + w * entro   (w folded into entro_ref in the wrapper;
        # only column 0 is real -- lane-dense store, caller slices column 0)
        out_ref[...] = o.astype(f32) + entro_ref[...]

    return kernel


def pointnetq_forward(x0_pad, s_onehot, st_onehot, inv_len, entro_scaled,
                      w_up, b_up, w_down, b_down, w_comb_p, w_comb_g, num_layers):
    act_dtype = _act_dtype()
    kernel = _make_kernel(num_layers, act_dtype)
    Gp = s_onehot.shape[0]
    Dp = x0_pad.shape[1]
    vmem = pl.BlockSpec(memory_space=pltpu.MemorySpace.VMEM)
    out = pl.pallas_call(
        kernel,
        out_shape=jax.ShapeDtypeStruct((Gp, Dp), jnp.float32),
        in_specs=[vmem] * 11,
        out_specs=vmem,
    )(x0_pad, s_onehot, st_onehot, inv_len, entro_scaled,
      w_up, b_up, w_down, b_down, w_comb_p, w_comb_g)
    return out  # (Gp, Dp): real output lives in rows [:G], column 0


def reference_forward(x0, S, inv_len, entro_col, w_scalar, raw_params, num_layers):
    """Plain-JAX f32 reference on the unpadded shapes."""
    (w1p, b1p, w2p, b2p, w1g, b1g, w2g, b2g, wc1, wc2, bc,
     wo1, bo1, wo2, bo2) = raw_params
    ST = S.T
    x = x0
    for l in range(num_layers):
        h = _leaky_relu(x @ w1p[l] + b1p[l])
        p = _leaky_relu(h @ w2p[l] + b2p[l])
        g = (S @ p) * inv_len
        hg = _leaky_relu(g @ w1g[l] + b1g[l])
        gu = _leaky_relu(hg @ w2g[l] + b2g[l])
        gu_pts = ST @ gu
        x = _leaky_relu(p @ wc1[l] + gu_pts @ wc2[l] + bc[l]) + x
    g = (S @ x) * inv_len
    h = _leaky_relu(g @ wo1 + bo1)
    o = _leaky_relu(h @ wo2 + bo2)
    return o + w_scalar * entro_col


if __name__ == "__main__":
    # --- module hyper-parameters (small, consistent with pointNetQ.__init__) ---
    embed_size = 8
    layers = 2
    mf = 2                               # multiple_factor
    d = embed_size * 5 * 2               # concat=True  -> d = 80
    dm = d * mf                          # hidden width of the MLPs = 160
    Dp = 128                             # d  padded to lane multiple
    DMp = 256                            # dm padded to lane multiple

    lengths = jnp.array([3, 5, 4, 4], dtype=jnp.int32)   # length_int
    G = int(lengths.shape[0])            # number of segments ("batch") = 4
    Gp = 8                               # G padded to a full sublane tile
    N = int(lengths.sum())               # total points = 16

    key = jax.random.PRNGKey(0)
    keys = iter(jax.random.split(key, 32))

    def nrm(k, shape, scale=0.05):
        return (scale * jax.random.normal(k, shape)).astype(jnp.float32)

    # --- deterministic parameter init (shapes from pointNetQ.__init__) ---
    embed_table = nrm(next(keys), (26, embed_size), 0.1)        # Embedding(26, embed_size)
    w1p = nrm(next(keys), (layers, d, dm)); b1p = nrm(next(keys), (layers, 1, dm))
    w2p = nrm(next(keys), (layers, dm, d)); b2p = nrm(next(keys), (layers, 1, d))
    w1g = nrm(next(keys), (layers, d, dm)); b1g = nrm(next(keys), (layers, 1, dm))
    w2g = nrm(next(keys), (layers, dm, d)); b2g = nrm(next(keys), (layers, 1, d))
    wc1 = nrm(next(keys), (layers, d, d))                        # combine weight, first half (p)
    wc2 = nrm(next(keys), (layers, d, d))                        # combine weight, second half (group)
    bc = nrm(next(keys), (layers, 1, d))
    wo1 = nrm(next(keys), (d, dm)); bo1 = nrm(next(keys), (1, dm))
    wo2 = nrm(next(keys), (dm, 1)); bo2 = nrm(next(keys), (1, 1))
    w_scalar = 0.13663686                                        # self.w
    raw_params = (w1p, b1p, w2p, b2p, w1g, b1g, w2g, b2g, wc1, wc2, bc,
                  wo1, bo1, wo2, bo2)

    # --- pack + zero-pad weights into lane-aligned blobs (kernel layout) ---
    def pad2(a, rows, cols):
        return jnp.pad(a, ((0, rows - a.shape[0]), (0, cols - a.shape[1])))

    up_list, bup_list, down_list, bdown_list = [], [], [], []
    combp_list, combg_list = [], []
    for l in range(layers):
        up_list += [pad2(w1p[l], Dp, DMp), pad2(w1g[l], Dp, DMp)]
        bup_list += [pad2(b1p[l], 1, DMp)[0], pad2(b1g[l], 1, DMp)[0]]
        down_list += [pad2(w2p[l], DMp, Dp), pad2(w2g[l], DMp, Dp)]
        bdown_list += [pad2(b2p[l], 1, Dp)[0], pad2(b2g[l], 1, Dp)[0],
                       pad2(bc[l], 1, Dp)[0]]
        combp_list.append(pad2(wc1[l], Dp, Dp))
        combg_list.append(pad2(wc2[l], Dp, Dp))
    up_list.append(pad2(wo1, Dp, DMp));   bup_list.append(pad2(bo1, 1, DMp)[0])
    down_list.append(pad2(wo2, DMp, Dp)); bdown_list.append(pad2(bo2, 1, Dp)[0])

    w_up = jnp.stack(up_list).astype(jnp.bfloat16)       # (2L+1, Dp, DMp)
    b_up = jnp.stack(bup_list)                           # (2L+1, DMp) f32
    w_down = jnp.stack(down_list).astype(jnp.bfloat16)   # (2L+1, DMp, Dp)
    b_down = jnp.stack(bdown_list)                       # (3L+1, Dp)  f32
    w_comb_p = jnp.stack(combp_list).astype(jnp.bfloat16)  # (L, Dp, Dp)
    w_comb_g = jnp.stack(combg_list).astype(jnp.bfloat16)  # (L, Dp, Dp)

    # --- deterministic example inputs (inference tuple: words, length_int, action, entro) ---
    words = jax.random.randint(next(keys), (N, 5), 0, 26)
    action = jax.random.randint(next(keys), (G, 5), 0, 26)
    entro = (0.3 * jax.random.normal(next(keys), (G,))).astype(jnp.float32)

    # --- glue (plain JAX): seg2all / all2seg, embedding lookups, initial concat ---
    seg2all = jnp.repeat(jnp.arange(G, dtype=jnp.int32), lengths)           # (N,)
    action_emb = embed_table[action].reshape(G, d // 2)
    words_emb = embed_table[words].reshape(N, d // 2)
    x0 = jnp.concatenate([action_emb[seg2all], words_emb], axis=1)          # (N, d)
    x0_pad = jnp.pad(x0, ((0, 0), (0, Dp - d)))                             # (N, Dp)

    S = (seg2all[None, :] == jnp.arange(G)[:, None]).astype(jnp.float32)    # (G, N) one-hot
    S_pad = jnp.pad(S, ((0, Gp - G), (0, 0)))                               # (Gp, N)
    s_onehot = S_pad.astype(jnp.bfloat16)                                   # exact 0/1 bf16
    st_onehot = S_pad.T.astype(jnp.bfloat16)                                # (N, Gp)
    inv_len_raw = (1.0 / lengths.astype(jnp.float32))[:, None]              # (G, 1)
    inv_len = jnp.pad(inv_len_raw, ((0, Gp - G), (0, 0)))                   # (Gp, 1), 0 for pad rows
    entro_scaled = jnp.pad(w_scalar * entro[:, None], ((0, Gp - G), (0, 0)))  # (Gp, 1): w*entro folded

    out = pointnetq_forward(x0_pad, s_onehot, st_onehot, inv_len, entro_scaled,
                            w_up, b_up, w_down, b_down, w_comb_p, w_comb_g, layers)
    out = jax.block_until_ready(out)
    result = out[:G, 0]                                                     # == out.squeeze() + w*entro

    ref = reference_forward(x0, S, inv_len_raw, entro[:, None], w_scalar,
                            raw_params, layers)
    assert jnp.allclose(result, ref[:, 0], atol=2e-2, rtol=2e-2), (result, ref[:, 0])
    print("KERNEL_OK")
</pallas_src>

<mosaic_0001>
module attributes {stable_mosaic.version = 11 : i64} {
  func.func @kernel(%arg0: memref<16x128xf32, #tpu.memory_space<vmem>>, %arg1: memref<8x16xbf16, #tpu.memory_space<vmem>>, %arg2: memref<16x8xbf16, #tpu.memory_space<vmem>>, %arg3: memref<8x1xf32, #tpu.memory_space<vmem>>, %arg4: memref<8x1xf32, #tpu.memory_space<vmem>>, %arg5: memref<5x128x256xbf16, #tpu.memory_space<vmem>>, %arg6: memref<5x256xf32, #tpu.memory_space<vmem>>, %arg7: memref<5x256x128xbf16, #tpu.memory_space<vmem>>, %arg8: memref<7x128xf32, #tpu.memory_space<vmem>>, %arg9: memref<2x128x128xbf16, #tpu.memory_space<vmem>>, %arg10: memref<2x128x128xbf16, #tpu.memory_space<vmem>>, %arg11: memref<8x128xf32, #tpu.memory_space<vmem>>) attributes {dimension_semantics = [], scalar_prefetch = 0 : i64, scratch_operands = 0 : i64, tpu.core_type = #tpu.core_type<tc>} {
    %c0 = arith.constant 0 : index
    %c0_0 = arith.constant 0 : index
    %0 = vector.load %arg0[%c0, %c0_0] : memref<16x128xf32, #tpu.memory_space<vmem>>, vector<16x128xf32>
    %c0_1 = arith.constant 0 : index
    %c0_2 = arith.constant 0 : index
    %1 = vector.load %arg1[%c0_1, %c0_2] : memref<8x16xbf16, #tpu.memory_space<vmem>>, vector<8x16xbf16>
    %c0_3 = arith.constant 0 : index
    %c0_4 = arith.constant 0 : index
    %2 = vector.load %arg2[%c0_3, %c0_4] : memref<16x8xbf16, #tpu.memory_space<vmem>>, vector<16x8xbf16>
    %c0_5 = arith.constant 0 : index
    %c0_6 = arith.constant 0 : index
    %3 = vector.load %arg3[%c0_5, %c0_6] : memref<8x1xf32, #tpu.memory_space<vmem>>, vector<8x1xf32>
    %4 = arith.truncf %0 : vector<16x128xf32> to vector<16x128xbf16>
    %c0_7 = arith.constant 0 : index
    %c0_8 = arith.constant 0 : index
    %c0_9 = arith.constant 0 : index
    %5 = vector.load %arg5[%c0_7, %c0_8, %c0_9] : memref<5x128x256xbf16, #tpu.memory_space<vmem>>, vector<1x128x256xbf16>
    %6 = vector.shape_cast %5 : vector<1x128x256xbf16> to vector<128x256xbf16>
    %cst = arith.constant dense<0.000000e+00> : vector<16x256xf32>
    %7 = tpu.matmul %4, %6, %cst {dimension_numbers = #tpu.dot_dimension_numbers<[1], [0], [0], [1], [0, 0, 1, 1], [], []>} : vector<16x128xbf16>, vector<128x256xbf16>, vector<16x256xf32> -> vector<16x256xf32>
    %c0_10 = arith.constant 0 : index
    %c0_11 = arith.constant 0 : index
    %8 = vector.load %arg6[%c0_10, %c0_11] : memref<5x256xf32, #tpu.memory_space<vmem>>, vector<1x256xf32>
    %9 = vector.shape_cast %8 : vector<1x256xf32> to vector<256xf32>
    %10 = vector.shape_cast %9 : vector<256xf32> to vector<1x256xf32>
    %11 = vector.broadcast %10 : vector<1x256xf32> to vector<16x256xf32>
    %12 = arith.addf %7, %11 : vector<16x256xf32>
    %cst_12 = arith.constant 0.00999999977 : f32
    %13 = vector.broadcast %cst_12 : f32 to vector<16x256xf32>
    %14 = arith.mulf %13, %12 : vector<16x256xf32>
    %15 = arith.maximumf %12, %14 : vector<16x256xf32>
    %16 = arith.truncf %15 : vector<16x256xf32> to vector<16x256xbf16>
    %c0_13 = arith.constant 0 : index
    %c0_14 = arith.constant 0 : index
    %c0_15 = arith.constant 0 : index
    %17 = vector.load %arg7[%c0_13, %c0_14, %c0_15] : memref<5x256x128xbf16, #tpu.memory_space<vmem>>, vector<1x256x128xbf16>
    %18 = vector.shape_cast %17 : vector<1x256x128xbf16> to vector<256x128xbf16>
    %cst_16 = arith.constant dense<0.000000e+00> : vector<16x128xf32>
    %19 = tpu.matmul %16, %18, %cst_16 {dimension_numbers = #tpu.dot_dimension_numbers<[1], [0], [0], [1], [0, 0, 1, 1], [], []>} : vector<16x256xbf16>, vector<256x128xbf16>, vector<16x128xf32> -> vector<16x128xf32>
    %c0_17 = arith.constant 0 : index
    %c0_18 = arith.constant 0 : index
    %20 = vector.load %arg8[%c0_17, %c0_18] : memref<7x128xf32, #tpu.memory_space<vmem>>, vector<1x128xf32>
    %21 = vector.shape_cast %20 : vector<1x128xf32> to vector<128xf32>
    %22 = vector.shape_cast %21 : vector<128xf32> to vector<1x128xf32>
    %23 = vector.broadcast %22 : vector<1x128xf32> to vector<16x128xf32>
    %24 = arith.addf %19, %23 : vector<16x128xf32>
    %cst_19 = arith.constant 0.00999999977 : f32
    %25 = vector.broadcast %cst_19 : f32 to vector<16x128xf32>
    %26 = arith.mulf %25, %24 : vector<16x128xf32>
    %27 = arith.maximumf %24, %26 : vector<16x128xf32>
    %28 = arith.truncf %27 : vector<16x128xf32> to vector<16x128xbf16>
    %cst_20 = arith.constant dense<0.000000e+00> : vector<8x128xf32>
    %29 = tpu.matmul %1, %28, %cst_20 {dimension_numbers = #tpu.dot_dimension_numbers<[1], [0], [0], [1], [0, 0, 1, 1], [], []>} : vector<8x16xbf16>, vector<16x128xbf16>, vector<8x128xf32> -> vector<8x128xf32>
    %30 = vector.broadcast %3 : vector<8x1xf32> to vector<8x128xf32>
    %31 = arith.mulf %29, %30 : vector<8x128xf32>
    %32 = arith.truncf %31 : vector<8x128xf32> to vector<8x128xbf16>
    %c1 = arith.constant 1 : index
    %c0_21 = arith.constant 0 : index
    %c0_22 = arith.constant 0 : index
    %33 = vector.load %arg5[%c1, %c0_21, %c0_22] : memref<5x128x256xbf16, #tpu.memory_space<vmem>>, vector<1x128x256xbf16>
    %34 = vector.shape_cast %33 : vector<1x128x256xbf16> to vector<128x256xbf16>
    %cst_23 = arith.constant dense<0.000000e+00> : vector<8x256xf32>
    %35 = tpu.matmul %32, %34, %cst_23 {dimension_numbers = #tpu.dot_dimension_numbers<[1], [0], [0], [1], [0, 0, 1, 1], [], []>} : vector<8x128xbf16>, vector<128x256xbf16>, vector<8x256xf32> -> vector<8x256xf32>
    %c1_24 = arith.constant 1 : index
    %c0_25 = arith.constant 0 : index
    %36 = vector.load %arg6[%c1_24, %c0_25] : memref<5x256xf32, #tpu.memory_space<vmem>>, vector<1x256xf32>
    %37 = vector.shape_cast %36 : vector<1x256xf32> to vector<256xf32>
    %38 = vector.shape_cast %37 : vector<256xf32> to vector<1x256xf32>
    %39 = vector.broadcast %38 : vector<1x256xf32> to vector<8x256xf32>
    %40 = arith.addf %35, %39 : vector<8x256xf32>
    %cst_26 = arith.constant 0.00999999977 : f32
    %41 = vector.broadcast %cst_26 : f32 to vector<8x256xf32>
    %42 = arith.mulf %41, %40 : vector<8x256xf32>
    %43 = arith.maximumf %40, %42 : vector<8x256xf32>
    %44 = arith.truncf %43 : vector<8x256xf32> to vector<8x256xbf16>
    %c1_27 = arith.constant 1 : index
    %c0_28 = arith.constant 0 : index
    %c0_29 = arith.constant 0 : index
    %45 = vector.load %arg7[%c1_27, %c0_28, %c0_29] : memref<5x256x128xbf16, #tpu.memory_space<vmem>>, vector<1x256x128xbf16>
    %46 = vector.shape_cast %45 : vector<1x256x128xbf16> to vector<256x128xbf16>
    %cst_30 = arith.constant dense<0.000000e+00> : vector<8x128xf32>
    %47 = tpu.matmul %44, %46, %cst_30 {dimension_numbers = #tpu.dot_dimension_numbers<[1], [0], [0], [1], [0, 0, 1, 1], [], []>} : vector<8x256xbf16>, vector<256x128xbf16>, vector<8x128xf32> -> vector<8x128xf32>
    %c1_31 = arith.constant 1 : index
    %c0_32 = arith.constant 0 : index
    %48 = vector.load %arg8[%c1_31, %c0_32] : memref<7x128xf32, #tpu.memory_space<vmem>>, vector<1x128xf32>
    %49 = vector.shape_cast %48 : vector<1x128xf32> to vector<128xf32>
    %50 = vector.shape_cast %49 : vector<128xf32> to vector<1x128xf32>
    %51 = vector.broadcast %50 : vector<1x128xf32> to vector<8x128xf32>
    %52 = arith.addf %47, %51 : vector<8x128xf32>
    %cst_33 = arith.constant 0.00999999977 : f32
    %53 = vector.broadcast %cst_33 : f32 to vector<8x128xf32>
    %54 = arith.mulf %53, %52 : vector<8x128xf32>
    %55 = arith.maximumf %52, %54 : vector<8x128xf32>
    %56 = arith.truncf %55 : vector<8x128xf32> to vector<8x128xbf16>
    %c0_34 = arith.constant 0 : index
    %c0_35 = arith.constant 0 : index
    %c0_36 = arith.constant 0 : index
    %57 = vector.load %arg10[%c0_34, %c0_35, %c0_36] : memref<2x128x128xbf16, #tpu.memory_space<vmem>>, vector<1x128x128xbf16>
    %58 = vector.shape_cast %57 : vector<1x128x128xbf16> to vector<128x128xbf16>
    %cst_37 = arith.constant dense<0.000000e+00> : vector<8x128xf32>
    %59 = tpu.matmul %56, %58, %cst_37 {dimension_numbers = #tpu.dot_dimension_numbers<[1], [0], [0], [1], [0, 0, 1, 1], [], []>} : vector<8x128xbf16>, vector<128x128xbf16>, vector<8x128xf32> -> vector<8x128xf32>
    %60 = arith.truncf %59 : vector<8x128xf32> to vector<8x128xbf16>
    %cst_38 = arith.constant dense<0.000000e+00> : vector<16x128xf32>
    %61 = tpu.matmul %2, %60, %cst_38 {dimension_numbers = #tpu.dot_dimension_numbers<[1], [0], [0], [1], [0, 0, 1, 1], [], []>} : vector<16x8xbf16>, vector<8x128xbf16>, vector<16x128xf32> -> vector<16x128xf32>
    %62 = arith.truncf %27 : vector<16x128xf32> to vector<16x128xbf16>
    %c0_39 = arith.constant 0 : index
    %c0_40 = arith.constant 0 : index
    %c0_41 = arith.constant 0 : index
    %63 = vector.load %arg9[%c0_39, %c0_40, %c0_41] : memref<2x128x128xbf16, #tpu.memory_space<vmem>>, vector<1x128x128xbf16>
    %64 = vector.shape_cast %63 : vector<1x128x128xbf16> to vector<128x128xbf16>
    %cst_42 = arith.constant dense<0.000000e+00> : vector<16x128xf32>
    %65 = tpu.matmul %62, %64, %cst_42 {dimension_numbers = #tpu.dot_dimension_numbers<[1], [0], [0], [1], [0, 0, 1, 1], [], []>} : vector<16x128xbf16>, vector<128x128xbf16>, vector<16x128xf32> -> vector<16x128xf32>
    %66 = arith.addf %65, %61 : vector<16x128xf32>
    %c2 = arith.constant 2 : index
    %c0_43 = arith.constant 0 : index
    %67 = vector.load %arg8[%c2, %c0_43] : memref<7x128xf32, #tpu.memory_space<vmem>>, vector<1x128xf32>
    %68 = vector.shape_cast %67 : vector<1x128xf32> to vector<128xf32>
    %69 = vector.shape_cast %68 : vector<128xf32> to vector<1x128xf32>
    %70 = vector.broadcast %69 : vector<1x128xf32> to vector<16x128xf32>
    %71 = arith.addf %66, %70 : vector<16x128xf32>
    %cst_44 = arith.constant 0.00999999977 : f32
    %72 = vector.broadcast %cst_44 : f32 to vector<16x128xf32>
    %73 = arith.mulf %72, %71 : vector<16x128xf32>
    %74 = arith.maximumf %71, %73 : vector<16x128xf32>
    %75 = arith.addf %74, %0 : vector<16x128xf32>
    %76 = arith.truncf %75 : vector<16x128xf32> to vector<16x128xbf16>
    %c2_45 = arith.constant 2 : index
    %c0_46 = arith.constant 0 : index
    %c0_47 = arith.constant 0 : index
    %77 = vector.load %arg5[%c2_45, %c0_46, %c0_47] : memref<5x128x256xbf16, #tpu.memory_space<vmem>>, vector<1x128x256xbf16>
    %78 = vector.shape_cast %77 : vector<1x128x256xbf16> to vector<128x256xbf16>
    %cst_48 = arith.constant dense<0.000000e+00> : vector<16x256xf32>
    %79 = tpu.matmul %76, %78, %cst_48 {dimension_numbers = #tpu.dot_dimension_numbers<[1], [0], [0], [1], [0, 0, 1, 1], [], []>} : vector<16x128xbf16>, vector<128x256xbf16>, vector<16x256xf32> -> vector<16x256xf32>
    %c2_49 = arith.constant 2 : index
    %c0_50 = arith.constant 0 : index
    %80 = vector.load %arg6[%c2_49, %c0_50] : memref<5x256xf32, #tpu.memory_space<vmem>>, vector<1x256xf32>
    %81 = vector.shape_cast %80 : vector<1x256xf32> to vector<256xf32>
    %82 = vector.shape_cast %81 : vector<256xf32> to vector<1x256xf32>
    %83 = vector.broadcast %82 : vector<1x256xf32> to vector<16x256xf32>
    %84 = arith.addf %79, %83 : vector<16x256xf32>
    %cst_51 = arith.constant 0.00999999977 : f32
    %85 = vector.broadcast %cst_51 : f32 to vector<16x256xf32>
    %86 = arith.mulf %85, %84 : vector<16x256xf32>
    %87 = arith.maximumf %84, %86 : vector<16x256xf32>
    %88 = arith.truncf %87 : vector<16x256xf32> to vector<16x256xbf16>
    %c2_52 = arith.constant 2 : index
    %c0_53 = arith.constant 0 : index
    %c0_54 = arith.constant 0 : index
    %89 = vector.load %arg7[%c2_52, %c0_53, %c0_54] : memref<5x256x128xbf16, #tpu.memory_space<vmem>>, vector<1x256x128xbf16>
    %90 = vector.shape_cast %89 : vector<1x256x128xbf16> to vector<256x128xbf16>
    %cst_55 = arith.constant dense<0.000000e+00> : vector<16x128xf32>
    %91 = tpu.matmul %88, %90, %cst_55 {dimension_numbers = #tpu.dot_dimension_numbers<[1], [0], [0], [1], [0, 0, 1, 1], [], []>} : vector<16x256xbf16>, vector<256x128xbf16>, vector<16x128xf32> -> vector<16x128xf32>
    %c3 = arith.constant 3 : index
    %c0_56 = arith.constant 0 : index
    %92 = vector.load %arg8[%c3, %c0_56] : memref<7x128xf32, #tpu.memory_space<vmem>>, vector<1x128xf32>
    %93 = vector.shape_cast %92 : vector<1x128xf32> to vector<128xf32>
    %94 = vector.shape_cast %93 : vector<128xf32> to vector<1x128xf32>
    %95 = vector.broadcast %94 : vector<1x128xf32> to vector<16x128xf32>
    %96 = arith.addf %91, %95 : vector<16x128xf32>
    %cst_57 = arith.constant 0.00999999977 : f32
    %97 = vector.broadcast %cst_57 : f32 to vector<16x128xf32>
    %98 = arith.mulf %97, %96 : vector<16x128xf32>
    %99 = arith.maximumf %96, %98 : vector<16x128xf32>
    %100 = arith.truncf %99 : vector<16x128xf32> to vector<16x128xbf16>
    %cst_58 = arith.constant dense<0.000000e+00> : vector<8x128xf32>
    %101 = tpu.matmul %1, %100, %cst_58 {dimension_numbers = #tpu.dot_dimension_numbers<[1], [0], [0], [1], [0, 0, 1, 1], [], []>} : vector<8x16xbf16>, vector<16x128xbf16>, vector<8x128xf32> -> vector<8x128xf32>
    %102 = vector.broadcast %3 : vector<8x1xf32> to vector<8x128xf32>
    %103 = arith.mulf %101, %102 : vector<8x128xf32>
    %104 = arith.truncf %103 : vector<8x128xf32> to vector<8x128xbf16>
    %c3_59 = arith.constant 3 : index
    %c0_60 = arith.constant 0 : index
    %c0_61 = arith.constant 0 : index
    %105 = vector.load %arg5[%c3_59, %c0_60, %c0_61] : memref<5x128x256xbf16, #tpu.memory_space<vmem>>, vector<1x128x256xbf16>
    %106 = vector.shape_cast %105 : vector<1x128x256xbf16> to vector<128x256xbf16>
    %cst_62 = arith.constant dense<0.000000e+00> : vector<8x256xf32>
    %107 = tpu.matmul %104, %106, %cst_62 {dimension_numbers = #tpu.dot_dimension_numbers<[1], [0], [0], [1], [0, 0, 1, 1], [], []>} : vector<8x128xbf16>, vector<128x256xbf16>, vector<8x256xf32> -> vector<8x256xf32>
    %c3_63 = arith.constant 3 : index
    %c0_64 = arith.constant 0 : index
    %108 = vector.load %arg6[%c3_63, %c0_64] : memref<5x256xf32, #tpu.memory_space<vmem>>, vector<1x256xf32>
    %109 = vector.shape_cast %108 : vector<1x256xf32> to vector<256xf32>
    %110 = vector.shape_cast %109 : vector<256xf32> to vector<1x256xf32>
    %111 = vector.broadcast %110 : vector<1x256xf32> to vector<8x256xf32>
    %112 = arith.addf %107, %111 : vector<8x256xf32>
    %cst_65 = arith.constant 0.00999999977 : f32
    %113 = vector.broadcast %cst_65 : f32 to vector<8x256xf32>
    %114 = arith.mulf %113, %112 : vector<8x256xf32>
    %115 = arith.maximumf %112, %114 : vector<8x256xf32>
    %116 = arith.truncf %115 : vector<8x256xf32> to vector<8x256xbf16>
    %c3_66 = arith.constant 3 : index
    %c0_67 = arith.constant 0 : index
    %c0_68 = arith.constant 0 : index
    %117 = vector.load %arg7[%c3_66, %c0_67, %c0_68] : memref<5x256x128xbf16, #tpu.memory_space<vmem>>, vector<1x256x128xbf16>
    %118 = vector.shape_cast %117 : vector<1x256x128xbf16> to vector<256x128xbf16>
    %cst_69 = arith.constant dense<0.000000e+00> : vector<8x128xf32>
    %119 = tpu.matmul %116, %118, %cst_69 {dimension_numbers = #tpu.dot_dimension_numbers<[1], [0], [0], [1], [0, 0, 1, 1], [], []>} : vector<8x256xbf16>, vector<256x128xbf16>, vector<8x128xf32> -> vector<8x128xf32>
    %c4 = arith.constant 4 : index
    %c0_70 = arith.constant 0 : index
    %120 = vector.load %arg8[%c4, %c0_70] : memref<7x128xf32, #tpu.memory_space<vmem>>, vector<1x128xf32>
    %121 = vector.shape_cast %120 : vector<1x128xf32> to vector<128xf32>
    %122 = vector.shape_cast %121 : vector<128xf32> to vector<1x128xf32>
    %123 = vector.broadcast %122 : vector<1x128xf32> to vector<8x128xf32>
    %124 = arith.addf %119, %123 : vector<8x128xf32>
    %cst_71 = arith.constant 0.00999999977 : f32
    %125 = vector.broadcast %cst_71 : f32 to vector<8x128xf32>
    %126 = arith.mulf %125, %124 : vector<8x128xf32>
    %127 = arith.maximumf %124, %126 : vector<8x128xf32>
    %128 = arith.truncf %127 : vector<8x128xf32> to vector<8x128xbf16>
    %c1_72 = arith.constant 1 : index
    %c0_73 = arith.constant 0 : index
    %c0_74 = arith.constant 0 : index
    %129 = vector.load %arg10[%c1_72, %c0_73, %c0_74] : memref<2x128x128xbf16, #tpu.memory_space<vmem>>, vector<1x128x128xbf16>
    %130 = vector.shape_cast %129 : vector<1x128x128xbf16> to vector<128x128xbf16>
    %cst_75 = arith.constant dense<0.000000e+00> : vector<8x128xf32>
    %131 = tpu.matmul %128, %130, %cst_75 {dimension_numbers = #tpu.dot_dimension_numbers<[1], [0], [0], [1], [0, 0, 1, 1], [], []>} : vector<8x128xbf16>, vector<128x128xbf16>, vector<8x128xf32> -> vector<8x128xf32>
    %132 = arith.truncf %131 : vector<8x128xf32> to vector<8x128xbf16>
    %cst_76 = arith.constant dense<0.000000e+00> : vector<16x128xf32>
    %133 = tpu.matmul %2, %132, %cst_76 {dimension_numbers = #tpu.dot_dimension_numbers<[1], [0], [0], [1], [0, 0, 1, 1], [], []>} : vector<16x8xbf16>, vector<8x128xbf16>, vector<16x128xf32> -> vector<16x128xf32>
    %134 = arith.truncf %99 : vector<16x128xf32> to vector<16x128xbf16>
    %c1_77 = arith.constant 1 : index
    %c0_78 = arith.constant 0 : index
    %c0_79 = arith.constant 0 : index
    %135 = vector.load %arg9[%c1_77, %c0_78, %c0_79] : memref<2x128x128xbf16, #tpu.memory_space<vmem>>, vector<1x128x128xbf16>
    %136 = vector.shape_cast %135 : vector<1x128x128xbf16> to vector<128x128xbf16>
    %cst_80 = arith.constant dense<0.000000e+00> : vector<16x128xf32>
    %137 = tpu.matmul %134, %136, %cst_80 {dimension_numbers = #tpu.dot_dimension_numbers<[1], [0], [0], [1], [0, 0, 1, 1], [], []>} : vector<16x128xbf16>, vector<128x128xbf16>, vector<16x128xf32> -> vector<16x128xf32>
    %138 = arith.addf %137, %133 : vector<16x128xf32>
    %c5 = arith.constant 5 : index
    %c0_81 = arith.constant 0 : index
    %139 = vector.load %arg8[%c5, %c0_81] : memref<7x128xf32, #tpu.memory_space<vmem>>, vector<1x128xf32>
    %140 = vector.shape_cast %139 : vector<1x128xf32> to vector<128xf32>
    %141 = vector.shape_cast %140 : vector<128xf32> to vector<1x128xf32>
    %142 = vector.broadcast %141 : vector<1x128xf32> to vector<16x128xf32>
    %143 = arith.addf %138, %142 : vector<16x128xf32>
    %cst_82 = arith.constant 0.00999999977 : f32
    %144 = vector.broadcast %cst_82 : f32 to vector<16x128xf32>
    %145 = arith.mulf %144, %143 : vector<16x128xf32>
    %146 = arith.maximumf %143, %145 : vector<16x128xf32>
    %147 = arith.addf %146, %75 : vector<16x128xf32>
    %148 = arith.truncf %147 : vector<16x128xf32> to vector<16x128xbf16>
    %cst_83 = arith.constant dense<0.000000e+00> : vector<8x128xf32>
    %149 = tpu.matmul %1, %148, %cst_83 {dimension_numbers = #tpu.dot_dimension_numbers<[1], [0], [0], [1], [0, 0, 1, 1], [], []>} : vector<8x16xbf16>, vector<16x128xbf16>, vector<8x128xf32> -> vector<8x128xf32>
    %150 = vector.broadcast %3 : vector<8x1xf32> to vector<8x128xf32>
    %151 = arith.mulf %149, %150 : vector<8x128xf32>
    %152 = arith.truncf %151 : vector<8x128xf32> to vector<8x128xbf16>
    %c4_84 = arith.constant 4 : index
    %c0_85 = arith.constant 0 : index
    %c0_86 = arith.constant 0 : index
    %153 = vector.load %arg5[%c4_84, %c0_85, %c0_86] : memref<5x128x256xbf16, #tpu.memory_space<vmem>>, vector<1x128x256xbf16>
    %154 = vector.shape_cast %153 : vector<1x128x256xbf16> to vector<128x256xbf16>
    %cst_87 = arith.constant dense<0.000000e+00> : vector<8x256xf32>
    %155 = tpu.matmul %152, %154, %cst_87 {dimension_numbers = #tpu.dot_dimension_numbers<[1], [0], [0], [1], [0, 0, 1, 1], [], []>} : vector<8x128xbf16>, vector<128x256xbf16>, vector<8x256xf32> -> vector<8x256xf32>
    %c4_88 = arith.constant 4 : index
    %c0_89 = arith.constant 0 : index
    %156 = vector.load %arg6[%c4_88, %c0_89] : memref<5x256xf32, #tpu.memory_space<vmem>>, vector<1x256xf32>
    %157 = vector.shape_cast %156 : vector<1x256xf32> to vector<256xf32>
    %158 = vector.shape_cast %157 : vector<256xf32> to vector<1x256xf32>
    %159 = vector.broadcast %158 : vector<1x256xf32> to vector<8x256xf32>
    %160 = arith.addf %155, %159 : vector<8x256xf32>
    %cst_90 = arith.constant 0.00999999977 : f32
    %161 = vector.broadcast %cst_90 : f32 to vector<8x256xf32>
    %162 = arith.mulf %161, %160 : vector<8x256xf32>
    %163 = arith.maximumf %160, %162 : vector<8x256xf32>
    %164 = arith.truncf %163 : vector<8x256xf32> to vector<8x256xbf16>
    %c4_91 = arith.constant 4 : index
    %c0_92 = arith.constant 0 : index
    %c0_93 = arith.constant 0 : index
    %165 = vector.load %arg7[%c4_91, %c0_92, %c0_93] : memref<5x256x128xbf16, #tpu.memory_space<vmem>>, vector<1x256x128xbf16>
    %166 = vector.shape_cast %165 : vector<1x256x128xbf16> to vector<256x128xbf16>
    %cst_94 = arith.constant dense<0.000000e+00> : vector<8x128xf32>
    %167 = tpu.matmul %164, %166, %cst_94 {dimension_numbers = #tpu.dot_dimension_numbers<[1], [0], [0], [1], [0, 0, 1, 1], [], []>} : vector<8x256xbf16>, vector<256x128xbf16>, vector<8x128xf32> -> vector<8x128xf32>
    %c6 = arith.constant 6 : index
    %c0_95 = arith.constant 0 : index
    %168 = vector.load %arg8[%c6, %c0_95] : memref<7x128xf32, #tpu.memory_space<vmem>>, vector<1x128xf32>
    %169 = vector.shape_cast %168 : vector<1x128xf32> to vector<128xf32>
    %170 = vector.shape_cast %169 : vector<128xf32> to vector<1x128xf32>
    %171 = vector.broadcast %170 : vector<1x128xf32> to vector<8x128xf32>
    %172 = arith.addf %167, %171 : vector<8x128xf32>
    %cst_96 = arith.constant 0.00999999977 : f32
    %173 = vector.broadcast %cst_96 : f32 to vector<8x128xf32>
    %174 = arith.mulf %173, %172 : vector<8x128xf32>
    %175 = arith.maximumf %172, %174 : vector<8x128xf32>
    %c0_97 = arith.constant 0 : index
    %c0_98 = arith.constant 0 : index
    %176 = vector.load %arg4[%c0_97, %c0_98] : memref<8x1xf32, #tpu.memory_space<vmem>>, vector<8x1xf32>
    %177 = vector.broadcast %176 : vector<8x1xf32> to vector<8x128xf32>
    %178 = arith.addf %175, %177 : vector<8x128xf32>
    %c0_99 = arith.constant 0 : index
    %c0_100 = arith.constant 0 : index
    %179 = vector.load %arg11[%c0_99, %c0_100] : memref<8x128xf32, #tpu.memory_space<vmem>>, vector<8x128xf32>
    tpu.vector_store %arg11[%c0_99, %c0_100], %178 {strides = array<i32>} : memref<8x128xf32, #tpu.memory_space<vmem>>, vector<8x128xf32>,
    return
  }
}

</mosaic_0001>

<llo_original>
// kernel: tpu_custom_call.1
$region0: #{tpu_custom_call.1}
  #allocation0 [shape = 'u32[]', space=smem, size = 0x4, offset = 0x4, fixed_abs, tag = 'smem constant byte address 0x4 - core index']
  #allocation1 [shape = 'u32[144,128]{1,0:T(1,128)}', space=vmem, size = 0x12000, scoped, tag = 'internal scratch']
  %s0 = inlined_call_operand.vmem [shape: f32[16,128], index: 0, kind: input, shape index: {}]
  %s1 = inlined_call_operand.hbm [shape: bf16[8,16], index: 1, kind: input, shape index: {}]
  %s2 = inlined_call_operand.vmem [shape: bf16[16,8], index: 2, kind: input, shape index: {}]
  %s3 = inlined_call_operand.vmem [shape: f32[8,1], index: 3, kind: input, shape index: {}]
  %s4 = inlined_call_operand.vmem [shape: f32[8,1], index: 4, kind: input, shape index: {}]
  %s5 = inlined_call_operand.hbm [shape: bf16[5,128,256], index: 5, kind: input, shape index: {}]
  %s6 = inlined_call_operand.vmem [shape: f32[5,256], index: 6, kind: input, shape index: {}]
  %s7 = inlined_call_operand.hbm [shape: bf16[5,256,128], index: 7, kind: input, shape index: {}]
  %s8 = inlined_call_operand.vmem [shape: f32[7,128], index: 8, kind: input, shape index: {}]
  %s9 = inlined_call_operand.hbm [shape: bf16[2,128,128], index: 9, kind: input, shape index: {}]
  %s10 = inlined_call_operand.hbm [shape: bf16[2,128,128], index: 10, kind: input, shape index: {}]
  %s11 = inlined_call_operand.hbm [shape: f32[8,128], index: 11, kind: output, shape index: {}]
  %s12 = sld [smem:[#allocation0]]
  $region74: #{tpu_custom_call.1} parent=0
    _
  %s14 = ssub.s32 1, %s12
  %s15 = scalar_select 0, %s14, %s12
  $region1: #{tpu_custom_call.1} parent=0
    #allocation2 [shape = 'u8[2048]{0}', space=vmem, size = 0x800, scoped, tag = 'input window, operand 1, single buffered']
    #allocation3 [shape = 's32[1]{0}', space=sflag, size = 0x4, scoped, tag = 'scoped memory for tpu_custom_call.1']
    #allocation4 [shape = 's32[1]{0}', space=sflag, size = 0x4, scoped, tag = 'scoped memory for tpu_custom_call.1']
    #allocation5 [shape = 'u8[327680]{0}', space=vmem, size = 0x50000, scoped, tag = 'input window, operand 5, single buffered']
    #allocation6 [shape = 's32[1]{0}', space=sflag, size = 0x4, scoped, tag = 'scoped memory for tpu_custom_call.1']
    #allocation7 [shape = 'u8[327680]{0}', space=vmem, size = 0x50000, scoped, tag = 'input window, operand 7, single buffered']
    #allocation8 [shape = 'u8[65536]{0}', space=vmem, size = 0x10000, scoped, tag = 'input window, operand 9, single buffered']
    #allocation9 [shape = 's32[1]{0}', space=sflag, size = 0x4, scoped, tag = 'scoped memory for tpu_custom_call.1']
    #allocation10 [shape = 'u8[65536]{0}', space=vmem, size = 0x10000, scoped, tag = 'input window, operand 10, single buffered']
    #allocation11 [shape = 'u8[4096]{0}', space=vmem, size = 0x1000, scoped, tag = 'output window, operand 0, single buffered']
    %16 = vsyncpa [#allocation3], 0
    %17 = vsyncpa [#allocation6], 0
    %18 = vsyncpa [#allocation9], 0
    %19 = vsyncpa [#allocation4], 0
    // Predicated region
    $region2: #{tpu_custom_call.1} parent=1 // pred_check
      _
    $region3: #{tpu_custom_call.1} parent=1 // pred_check_branch
      %21 = sbr.rel (0) target = $region5
    $region4: #{tpu_custom_call.1} parent=1 // pred_region
      _
    $region5: #{tpu_custom_call.1} parent=1 // pred_fallthru
      _
    // Predicated region
    $region6: #{tpu_custom_call.1} parent=1 // pred_check
      _
    $region7: #{tpu_custom_call.1} parent=1 // pred_check_branch
      %23 = sbr.rel (0) target = $region9
    $region8: #{tpu_custom_call.1} parent=1 // pred_region
      %s25 = ssub.s32 64, 64
      %26 = vsyncadd [#allocation3], %s25
      %s28 = sshll.u32 [#allocation2], 4
      %s29 = int_to_ptr.vmem [resolvable:$true] %s28
      %31 = dma.hbm_to_vmem [thread:$0]  %s1, 64, %s29, [#allocation3]
    $region9: #{tpu_custom_call.1} parent=1 // pred_fallthru
      _
    // Predicated region
    $region10: #{tpu_custom_call.1} parent=1 // pred_check
      _
    $region11: #{tpu_custom_call.1} parent=1 // pred_check_branch
      %33 = sbr.rel (0) target = $region13
    $region12: #{tpu_custom_call.1} parent=1 // pred_region
      _
    $region13: #{tpu_custom_call.1} parent=1 // pred_fallthru
      _
    // Predicated region
    $region14: #{tpu_custom_call.1} parent=1 // pred_check
      _
    $region15: #{tpu_custom_call.1} parent=1 // pred_check_branch
      %35 = sbr.rel (0) target = $region17
    $region16: #{tpu_custom_call.1} parent=1 // pred_region
      _
    $region17: #{tpu_custom_call.1} parent=1 // pred_fallthru
      _
    // Predicated region
    $region18: #{tpu_custom_call.1} parent=1 // pred_check
      _
    $region19: #{tpu_custom_call.1} parent=1 // pred_check_branch
      %37 = sbr.rel (0) target = $region21
    $region20: #{tpu_custom_call.1} parent=1 // pred_region
      _
    $region21: #{tpu_custom_call.1} parent=1 // pred_fallthru
      _
    // Predicated region
    $region22: #{tpu_custom_call.1} parent=1 // pred_check
      _
    $region23: #{tpu_custom_call.1} parent=1 // pred_check_branch
      %39 = sbr.rel (0) target = $region25
    $region24: #{tpu_custom_call.1} parent=1 // pred_region
      %s41 = ssub.s32 10240, 10240
      %42 = vsyncadd [#allocation6], %s41
      %s43 = sshll.u32 [#allocation5], 4
      %s44 = int_to_ptr.vmem [resolvable:$true] %s43
      %49 = dma.hbm_to_vmem [thread:$0]  %s5, 10240, %s44, [#allocation6], 128, 128, 8
    $region25: #{tpu_custom_call.1} parent=1 // pred_fallthru
      _
    // Predicated region
    $region26: #{tpu_custom_call.1} parent=1 // pred_check
      _
    $region27: #{tpu_custom_call.1} parent=1 // pred_check_branch
      %51 = sbr.rel (0) target = $region29
    $region28: #{tpu_custom_call.1} parent=1 // pred_region
      _
    $region29: #{tpu_custom_call.1} parent=1 // pred_fallthru
      _
    // Predicated region
    $region30: #{tpu_custom_call.1} parent=1 // pred_check
      _
    $region31: #{tpu_custom_call.1} parent=1 // pred_check_branch
      %53 = sbr.rel (0) target = $region33
    $region32: #{tpu_custom_call.1} parent=1 // pred_region
      %s55 = ssub.s32 10240, 10240
      %56 = vsyncadd [#allocation6], %s55
      %s57 = sshll.u32 [#allocation7], 4
      %s58 = int_to_ptr.vmem [resolvable:$true] %s57
      %63 = dma.hbm_to_vmem [thread:$0]  %s7, 10240, %s58, [#allocation6], 64, 64, 4
    $region33: #{tpu_custom_call.1} parent=1 // pred_fallthru
      _
    // Predicated region
    $region34: #{tpu_custom_call.1} parent=1 // pred_check
      _
    $region35: #{tpu_custom_call.1} parent=1 // pred_check_branch
      %65 = sbr.rel (0) target = $region37
    $region36: #{tpu_custom_call.1} parent=1 // pred_region
      _
    $region37: #{tpu_custom_call.1} parent=1 // pred_fallthru
      _
    // Predicated region
    $region38: #{tpu_custom_call.1} parent=1 // pred_check
      _
    $region39: #{tpu_custom_call.1} parent=1 // pred_check_branch
      %67 = sbr.rel (0) target = $region41
    $region40: #{tpu_custom_call.1} parent=1 // pred_region
      %s69 = ssub.s32 2048, 2048
      %70 = vsyncadd [#allocation9], %s69
      %s71 = sshll.u32 [#allocation8], 4
      %s72 = int_to_ptr.vmem [resolvable:$true] %s71
      %77 = dma.hbm_to_vmem [thread:$0]  %s9, 2048, %s72, [#allocation9], 64, 64, 4
    $region41: #{tpu_custom_call.1} parent=1 // pred_fallthru
      _
    // Predicated region
    $region42: #{tpu_custom_call.1} parent=1 // pred_check
      _
    $region43: #{tpu_custom_call.1} parent=1 // pred_check_branch
      %79 = sbr.rel (0) target = $region45
    $region44: #{tpu_custom_call.1} parent=1 // pred_region
      %s81 = ssub.s32 2048, 2048
      %82 = vsyncadd [#allocation9], %s81
      %s83 = sshll.u32 [#allocation10], 4
      %s84 = int_to_ptr.vmem [resolvable:$true] %s83
      %89 = dma.hbm_to_vmem [thread:$0]  %s10, 2048, %s84, [#allocation9], 64, 64, 4
    $region45: #{tpu_custom_call.1} parent=1 // pred_fallthru
      _
    // Predicated region
    $region46: #{tpu_custom_call.1} parent=1 // pred_check
      _
    $region47: #{tpu_custom_call.1} parent=1 // pred_check_branch
      %91 = sbr.rel (0) target = $region49
    $region48: #{tpu_custom_call.1} parent=1 // pred_region
      %92 = dma.done [#allocation3], 64
    $region49: #{tpu_custom_call.1} parent=1 // pred_fallthru
      _
    // Predicated region
    $region50: #{tpu_custom_call.1} parent=1 // pred_check
      _
    $region51: #{tpu_custom_call.1} parent=1 // pred_check_branch
      %94 = sbr.rel (0) target = $region53
    $region52: #{tpu_custom_call.1} parent=1 // pred_region
      %95 = dma.done [#allocation6], 10240
    $region53: #{tpu_custom_call.1} parent=1 // pred_fallthru
      _
    // Predicated region
    $region54: #{tpu_custom_call.1} parent=1 // pred_check
      _
    $region55: #{tpu_custom_call.1} parent=1 // pred_check_branch
      %97 = sbr.rel (0) target = $region57
    $region56: #{tpu_custom_call.1} parent=1 // pred_region
      %98 = dma.done [#allocation6], 10240
    $region57: #{tpu_custom_call.1} parent=1 // pred_fallthru
      _
    // Predicated region
    $region58: #{tpu_custom_call.1} parent=1 // pred_check
      _
    $region59: #{tpu_custom_call.1} parent=1 // pred_check_branch
      %100 = sbr.rel (0) target = $region61
    $region60: #{tpu_custom_call.1} parent=1 // pred_region
      %101 = dma.done [#allocation9], 2048
    $region61: #{tpu_custom_call.1} parent=1 // pred_fallthru
      _
    // Predicated region
    $region62: #{tpu_custom_call.1} parent=1 // pred_check
      _
    $region63: #{tpu_custom_call.1} parent=1 // pred_check_branch
      %103 = sbr.rel (0) target = $region65
    $region64: #{tpu_custom_call.1} parent=1 // pred_region
      %104 = dma.done [#allocation9], 2048
    $region65: #{tpu_custom_call.1} parent=1 // pred_fallthru
      _
    %v106 = vld [vmem:[%s0] sm:$0xff]
    %v107 = vld [vmem:[%s0 + $0x8] sm:$0xff]
    %v108 = vld [vmem:[#allocation2] sm:$0xf]
    %v109 = vld [vmem:[%s2] sm:$0xf]
    %v110 = vld [vmem:[%s2 + $0x4] sm:$0xf]
    %v111 = vld [vmem:[%s3] sm:$0xff]
    %v112 = vpack.c.bf16 %v107, %v106
    %v113 = vld [vmem:[#allocation5] sm:$0xff]
    %v114 = vld [vmem:[#allocation5 + $0x8] sm:$0xff]
    %v115 = vld [vmem:[#allocation5 + $0x10] sm:$0xff]
    %v116 = vld [vmem:[#allocation5 + $0x18] sm:$0xff]
    %v117 = vld [vmem:[#allocation5 + $0x20] sm:$0xff]
    %v118 = vld [vmem:[#allocation5 + $0x28] sm:$0xff]
    %v119 = vld [vmem:[#allocation5 + $0x30] sm:$0xff]
    %v120 = vld [vmem:[#allocation5 + $0x38] sm:$0xff]
    %v121 = vld [vmem:[#allocation5 + $0x40] sm:$0xff]
    %v122 = vld [vmem:[#allocation5 + $0x48] sm:$0xff]
    %v123 = vld [vmem:[#allocation5 + $0x50] sm:$0xff]
    %v124 = vld [vmem:[#allocation5 + $0x58] sm:$0xff]
    %v125 = vld [vmem:[#allocation5 + $0x60] sm:$0xff]
    %v126 = vld [vmem:[#allocation5 + $0x68] sm:$0xff]
    %v127 = vld [vmem:[#allocation5 + $0x70] sm:$0xff]
    %v128 = vld [vmem:[#allocation5 + $0x78] sm:$0xff]
    %v129 = vld [vmem:[%s6] ss:$8 sm:$0x3]
    %v131 = vlaneseq
    %v132 = vshrl.u32 %v131, 7
    %v133 = vsub.s32 0, %v132
    %v134 = vrot.slane %v129, %v133
    %v135 = vlaneseq
    %v136 = vshrl.u32 %v135, 7
    %v137 = vsub.s32 1, %v136
    %v138 = vrot.slane %v129, %v137
    %v157 = vunpack.c.l.b16 %v113
    %v158 = vunpack.c.h.b16 %v113
    %v159 = vunpack.c.l.b16 %v114
    %v160 = vunpack.c.h.b16 %v114
    %v161 = vunpack.c.l.b16 %v115
    %v162 = vunpack.c.h.b16 %v115
    %v163 = vunpack.c.l.b16 %v116
    %v164 = vunpack.c.h.b16 %v116
    %v165 = vunpack.c.l.b16 %v117
    %v166 = vunpack.c.h.b16 %v117
    %v167 = vunpack.c.l.b16 %v118
    %v168 = vunpack.c.h.b16 %v118
    %v169 = vunpack.c.l.b16 %v119
    %v170 = vunpack.c.h.b16 %v119
    %v171 = vunpack.c.l.b16 %v120
    %v172 = vunpack.c.h.b16 %v120
    %v173 = vunpack.c.l.b16 %v121
    %v174 = vunpack.c.h.b16 %v121
    %v175 = vunpack.c.l.b16 %v122
    %v176 = vunpack.c.h.b16 %v122
    %v177 = vunpack.c.l.b16 %v123
    %v178 = vunpack.c.h.b16 %v123
    %v179 = vunpack.c.l.b16 %v124
    %v180 = vunpack.c.h.b16 %v124
    %v181 = vunpack.c.l.b16 %v125
    %v182 = vunpack.c.h.b16 %v125
    %v183 = vunpack.c.l.b16 %v126
    %v184 = vunpack.c.h.b16 %v126
    %v185 = vunpack.c.l.b16 %v127
    %v186 = vunpack.c.h.b16 %v127
    %v187 = vunpack.c.l.b16 %v128
    %v188 = vunpack.c.h.b16 %v128
    %v189 = vpack.c.b16 %v159, %v157
    %v190 = vpack.c.b16 %v160, %v158
    %v191 = vpack.c.b16 %v163, %v161
    %v192 = vpack.c.b16 %v164, %v162
    %v193 = vpack.c.b16 %v167, %v165
    %v194 = vpack.c.b16 %v168, %v166
    %v195 = vpack.c.b16 %v171, %v169
    %v196 = vpack.c.b16 %v172, %v170
    %v197 = vpack.c.b16 %v175, %v173
    %v198 = vpack.c.b16 %v176, %v174
    %v199 = vpack.c.b16 %v179, %v177
    %v200 = vpack.c.b16 %v180, %v178
    %v201 = vpack.c.b16 %v183, %v181
    %v202 = vpack.c.b16 %v184, %v182
    %v203 = vpack.c.b16 %v187, %v185
    %v204 = vpack.c.b16 %v188, %v186
    %221 = vmatprep.subr.bf16.mxu0 %v190
    %222 = vmatpush1.bf16.msra.mxu0 %v189
    %223 = vmatprep.subr.bf16.mxu0 %v192
    %224 = vmatpush1.bf16.msra.mxu0 %v191
    %225 = vmatprep.subr.bf16.mxu0 %v194
    %226 = vmatpush1.bf16.msra.mxu0 %v193
    %227 = vmatprep.subr.bf16.mxu0 %v196
    %228 = vmatpush1.bf16.msra.mxu0 %v195
    %229 = vmatprep.subr.bf16.mxu0 %v198
    %230 = vmatpush1.bf16.msra.mxu0 %v197
    %231 = vmatprep.subr.bf16.mxu0 %v200
    %232 = vmatpush1.bf16.msra.mxu0 %v199
    %233 = vmatprep.subr.bf16.mxu0 %v202
    %234 = vmatpush1.bf16.msra.mxu0 %v201
    %235 = vmatprep.subr.bf16.mxu0 %v204
    %236 = vmatpush1.bf16.msra.mxu0 %v203
    %237 = vmatprep.subr.bf16.mxu0 0
    %238 = vmatpush1.bf16.msra.mxu0 0
    %239 = vmatprep.subr.bf16.mxu0 0
    %240 = vmatpush1.bf16.msra.mxu0 0
    %241 = vmatprep.subr.bf16.mxu0 0
    %242 = vmatpush1.bf16.msra.mxu0 0
    %243 = vmatprep.subr.bf16.mxu0 0
    %244 = vmatpush1.bf16.msra.mxu0 0
    %245 = vmatprep.subr.bf16.mxu0 0
    %246 = vmatpush1.bf16.msra.mxu0 0
    %247 = vmatprep.subr.bf16.mxu0 0
    %248 = vmatpush1.bf16.msra.mxu0 0
    %249 = vmatprep.subr.bf16.mxu0 0
    %250 = vmatpush1.bf16.msra.mxu0 0
    %251 = vmatprep.subr.bf16.mxu0 0
    %252 = vmatpush1.bf16.msra.mxu0 0
    %253 = vmatprep.mubr.bf16.mxu0 0
    %254 = vmatmul.mubr.bf16.gmra.mrb[0].mxu0 %v112
    %v255 = vpop.f32.mrb[0].mxu0
    %v256 = vadd.f32 %v134, %v255
    %v257 = vpop.f32.mrb[0].mxu0
    %v258 = vadd.f32 %v138, %v257
    %v259 = vpop.f32.mrb[0].mxu0
    %v260 = vadd.f32 %v134, %v259
    %v261 = vpop.f32.mrb[0].mxu0
    %v262 = vadd.f32 %v138, %v261
    %263 = vdwg.mxu0
    %v264 = vmul.f32 %v256, 0.01
    %v265 = vmul.f32 %v258, 0.01
    %v266 = vmul.f32 %v260, 0.01
    %v267 = vmul.f32 %v262, 0.01
    %v268 = vmax.f32 %v256, %v264
    %v269 = vmax.f32 %v258, %v265
    %v270 = vmax.f32 %v260, %v266
    %v271 = vmax.f32 %v262, %v267
    %v272 = vpack.c.bf16 %v270, %v268
    %v273 = vpack.c.bf16 %v271, %v269
    %v274 = vld [vmem:[#allocation7] sm:$0xf]
    %v275 = vld [vmem:[#allocation7 + $0x4] sm:$0xf]
    %v276 = vld [vmem:[#allocation7 + $0x8] sm:$0xf]
    %v277 = vld [vmem:[#allocation7 + $0xc] sm:$0xf]
    %v278 = vld [vmem:[#allocation7 + $0x10] sm:$0xf]
    %v279 = vld [vmem:[#allocation7 + $0x14] sm:$0xf]
    %v280 = vld [vmem:[#allocation7 + $0x18] sm:$0xf]
    %v281 = vld [vmem:[#allocation7 + $0x1c] sm:$0xf]
    %v282 = vld [vmem:[#allocation7 + $0x20] sm:$0xf]
    %v283 = vld [vmem:[#allocation7 + $0x24] sm:$0xf]
    %v284 = vld [vmem:[#allocation7 + $0x28] sm:$0xf]
    %v285 = vld [vmem:[#allocation7 + $0x2c] sm:$0xf]
    %v286 = vld [vmem:[#allocation7 + $0x30] sm:$0xf]
    %v287 = vld [vmem:[#allocation7 + $0x34] sm:$0xf]
    %v288 = vld [vmem:[#allocation7 + $0x38] sm:$0xf]
    %v289 = vld [vmem:[#allocation7 + $0x3c] sm:$0xf]
    %v290 = vld [vmem:[#allocation7 + $0x40] sm:$0xf]
    %v291 = vld [vmem:[#allocation7 + $0x44] sm:$0xf]
    %v292 = vld [vmem:[#allocation7 + $0x48] sm:$0xf]
    %v293 = vld [vmem:[#allocation7 + $0x4c] sm:$0xf]
    %v294 = vld [vmem:[#allocation7 + $0x50] sm:$0xf]
    %v295 = vld [vmem:[#allocation7 + $0x54] sm:$0xf]
    %v296 = vld [vmem:[#allocation7 + $0x58] sm:$0xf]
    %v297 = vld [vmem:[#allocation7 + $0x5c] sm:$0xf]
    %v298 = vld [vmem:[#allocation7 + $0x60] sm:$0xf]
    %v299 = vld [vmem:[#allocation7 + $0x64] sm:$0xf]
    %v300 = vld [vmem:[#allocation7 + $0x68] sm:$0xf]
    %v301 = vld [vmem:[#allocation7 + $0x6c] sm:$0xf]
    %v302 = vld [vmem:[#allocation7 + $0x70] sm:$0xf]
    %v303 = vld [vmem:[#allocation7 + $0x74] sm:$0xf]
    %v304 = vld [vmem:[#allocation7 + $0x78] sm:$0xf]
    %v305 = vld [vmem:[#allocation7 + $0x7c] sm:$0xf]
    %v306 = vld [vmem:[%s8] sm:$0x1]
    %v307 = vlaneseq
    %v308 = vshrl.u32 %v307, 7
    %v309 = vsub.s32 0, %v308
    %v310 = vrot.slane %v306, %v309
    %v343 = vunpack.c.l.b16 %v274
    %v344 = vunpack.c.l.b16 %v275
    %v345 = vunpack.c.l.b16 %v276
    %v346 = vunpack.c.l.b16 %v277
    %v347 = vunpack.c.l.b16 %v278
    %v348 = vunpack.c.l.b16 %v279
    %v349 = vunpack.c.l.b16 %v280
    %v350 = vunpack.c.l.b16 %v281
    %v351 = vunpack.c.l.b16 %v282
    %v352 = vunpack.c.l.b16 %v283
    %v353 = vunpack.c.l.b16 %v284
    %v354 = vunpack.c.l.b16 %v285
    %v355 = vunpack.c.l.b16 %v286
    %v356 = vunpack.c.l.b16 %v287
    %v357 = vunpack.c.l.b16 %v288
    %v358 = vunpack.c.l.b16 %v289
    %v359 = vunpack.c.l.b16 %v290
    %v360 = vunpack.c.l.b16 %v291
    %v361 = vunpack.c.l.b16 %v292
    %v362 = vunpack.c.l.b16 %v293
    %v363 = vunpack.c.l.b16 %v294
    %v364 = vunpack.c.l.b16 %v295
    %v365 = vunpack.c.l.b16 %v296
    %v366 = vunpack.c.l.b16 %v297
    %v367 = vunpack.c.l.b16 %v298
    %v368 = vunpack.c.l.b16 %v299
    %v369 = vunpack.c.l.b16 %v300
    %v370 = vunpack.c.l.b16 %v301
    %v371 = vunpack.c.l.b16 %v302
    %v372 = vunpack.c.l.b16 %v303
    %v373 = vunpack.c.l.b16 %v304
    %v374 = vunpack.c.l.b16 %v305
    %v375 = vpack.c.b16 %v344, %v343
    %v376 = vpack.c.b16 %v346, %v345
    %v377 = vpack.c.b16 %v348, %v347
    %v378 = vpack.c.b16 %v350, %v349
    %v379 = vpack.c.b16 %v352, %v351
    %v380 = vpack.c.b16 %v354, %v353
    %v381 = vpack.c.b16 %v356, %v355
    %v382 = vpack.c.b16 %v358, %v357
    %v383 = vpack.c.b16 %v360, %v359
    %v384 = vpack.c.b16 %v362, %v361
    %v385 = vpack.c.b16 %v364, %v363
    %v386 = vpack.c.b16 %v366, %v365
    %v387 = vpack.c.b16 %v368, %v367
    %v388 = vpack.c.b16 %v370, %v369
    %v389 = vpack.c.b16 %v372, %v371
    %v390 = vpack.c.b16 %v374, %v373
    %407 = vmatprep.subr.bf16.mxu0 0
    %408 = vmatpush1.bf16.msra.mxu0 %v375
    %409 = vmatprep.subr.bf16.mxu0 0
    %410 = vmatpush1.bf16.msra.mxu0 %v376
    %411 = vmatprep.subr.bf16.mxu0 0
    %412 = vmatpush1.bf16.msra.mxu0 %v377
    %413 = vmatprep.subr.bf16.mxu0 0
    %414 = vmatpush1.bf16.msra.mxu0 %v378
    %415 = vmatprep.subr.bf16.mxu0 0
    %416 = vmatpush1.bf16.msra.mxu0 %v379
    %417 = vmatprep.subr.bf16.mxu0 0
    %418 = vmatpush1.bf16.msra.mxu0 %v380
    %419 = vmatprep.subr.bf16.mxu0 0
    %420 = vmatpush1.bf16.msra.mxu0 %v381
    %421 = vmatprep.subr.bf16.mxu0 0
    %422 = vmatpush1.bf16.msra.mxu0 %v382
    %423 = vmatprep.subr.bf16.mxu0 0
    %424 = vmatpush1.bf16.msra.mxu0 %v383
    %425 = vmatprep.subr.bf16.mxu0 0
    %426 = vmatpush1.bf16.msra.mxu0 %v384
    %427 = vmatprep.subr.bf16.mxu0 0
    %428 = vmatpush1.bf16.msra.mxu0 %v385
    %429 = vmatprep.subr.bf16.mxu0 0
    %430 = vmatpush1.bf16.msra.mxu0 %v386
    %431 = vmatprep.subr.bf16.mxu0 0
    %432 = vmatpush1.bf16.msra.mxu0 %v387
    %433 = vmatprep.subr.bf16.mxu0 0
    %434 = vmatpush1.bf16.msra.mxu0 %v388
    %435 = vmatprep.subr.bf16.mxu0 0
    %436 = vmatpush1.bf16.msra.mxu0 %v389
    %437 = vmatprep.subr.bf16.mxu0 0
    %438 = vmatpush1.bf16.msra.mxu0 %v390
    %439 = vmatprep.mubr.bf16.mxu0 %v273
    %440 = vmatmul.mubr.bf16.gmra.mrb[0].mxu0 %v272
    %v441 = vpop.f32.mrb[0].mxu0
    %v442 = vadd.f32 %v310, %v441
    %v443 = vpop.f32.mrb[0].mxu0
    %v444 = vpop.f32.mrb[0].mxu0
    %v445 = vadd.f32 %v310, %v444
    %v446 = vpop.f32.mrb[0].mxu0
    %447 = vdwg.mxu0
    %v448 = vmul.f32 %v442, 0.01
    %v449 = vmul.f32 %v445, 0.01
    %v450 = vmax.f32 %v442, %v448
    %v451 = vmax.f32 %v445, %v449
    %v452 = vpack.c.bf16 %v451, %v450
    %vm453 = vcmask 130048
    %v455 = vsel %vm453, %v108, 0
    %457 = vmatprep.subr.bf16.mxu0 0
    %458 = vmatpush1.bf16.msra.mxu0 %v452
    %459 = vmatprep.subr.bf16.mxu0 0
    %460 = vmatpush1.bf16.msra.mxu0 0
    %461 = vmatprep.subr.bf16.mxu0 0
    %462 = vmatpush1.bf16.msra.mxu0 0
    %463 = vmatprep.subr.bf16.mxu0 0
    %464 = vmatpush1.bf16.msra.mxu0 0
    %465 = vmatprep.subr.bf16.mxu0 0
    %466 = vmatpush1.bf16.msra.mxu0 0
    %467 = vmatprep.subr.bf16.mxu0 0
    %468 = vmatpush1.bf16.msra.mxu0 0
    %469 = vmatprep.subr.bf16.mxu0 0
    %470 = vmatpush1.bf16.msra.mxu0 0
    %471 = vmatprep.subr.bf16.mxu0 0
    %472 = vmatpush1.bf16.msra.mxu0 0
    %473 = vmatprep.subr.bf16.mxu0 0
    %474 = vmatpush1.bf16.msra.mxu0 0
    %475 = vmatprep.subr.bf16.mxu0 0
    %476 = vmatpush1.bf16.msra.mxu0 0
    %477 = vmatprep.subr.bf16.mxu0 0
    %478 = vmatpush1.bf16.msra.mxu0 0
    %479 = vmatprep.subr.bf16.mxu0 0
    %480 = vmatpush1.bf16.msra.mxu0 0
    %481 = vmatprep.subr.bf16.mxu0 0
    %482 = vmatpush1.bf16.msra.mxu0 0
    %483 = vmatprep.subr.bf16.mxu0 0
    %484 = vmatpush1.bf16.msra.mxu0 0
    %485 = vmatprep.subr.bf16.mxu0 0
    %486 = vmatpush1.bf16.msra.mxu0 0
    %487 = vmatprep.subr.bf16.mxu0 0
    %488 = vmatpush1.bf16.msra.mxu0 0
    %489 = vmatprep.mubr.bf16.mxu0 0
    %490 = vmatmul.mubr.bf16.gmra.mrb[0].mxu0 %v455
    %v491 = vpop.f32.mrb[0].mxu0
    %v492 = vadd.f32 0.0, %v491
    %v493 = vpop.f32.mrb[0].mxu0
    %v494 = vpop.f32.mrb[0].mxu0
    %v495 = vpop.f32.mrb[0].mxu0
    %496 = vdwg.mxu0
    %498 = vset.pattern.permute.xlu0 0
    %499 = vperm.xlu0 %498, %v111
    %v500 = vpop.permute.xlu0 %499
    %v502 = vmul.f32 %v492, %v500
    %v503 = vpack.c.bf16 %v502, %v502
    %s504 = scalar_lea.vmem [#allocation5], 128
    %v505 = vld [vmem:[%s504] sm:$0xff]
    %v506 = vld [vmem:[%s504 + $0x8] sm:$0xff]
    %v507 = vld [vmem:[%s504 + $0x10] sm:$0xff]
    %v508 = vld [vmem:[%s504 + $0x18] sm:$0xff]
    %v509 = vld [vmem:[%s504 + $0x20] sm:$0xff]
    %v510 = vld [vmem:[%s504 + $0x28] sm:$0xff]
    %v511 = vld [vmem:[%s504 + $0x30] sm:$0xff]
    %v512 = vld [vmem:[%s504 + $0x38] sm:$0xff]
    %v513 = vld [vmem:[%s504 + $0x40] sm:$0xff]
    %v514 = vld [vmem:[%s504 + $0x48] sm:$0xff]
    %v515 = vld [vmem:[%s504 + $0x50] sm:$0xff]
    %v516 = vld [vmem:[%s504 + $0x58] sm:$0xff]
    %v517 = vld [vmem:[%s504 + $0x60] sm:$0xff]
    %v518 = vld [vmem:[%s504 + $0x68] sm:$0xff]
    %v519 = vld [vmem:[%s504 + $0x70] sm:$0xff]
    %v520 = vld [vmem:[%s504 + $0x78] sm:$0xff]
    %s521 = scalar_lea.vmem %s6, 1
    %v522 = vld [vmem:[%s521] ss:$8 sm:$0x3]
    %v524 = vlaneseq
    %v525 = vshrl.u32 %v524, 7
    %v526 = vsub.s32 0, %v525
    %v527 = vrot.slane %v522, %v526
    %v528 = vlaneseq
    %v529 = vshrl.u32 %v528, 7
    %v530 = vsub.s32 1, %v529
    %v531 = vrot.slane %v522, %v530
    %v550 = vunpack.c.l.b16 %v505
    %v551 = vunpack.c.h.b16 %v505
    %v552 = vunpack.c.l.b16 %v506
    %v553 = vunpack.c.h.b16 %v506
    %v554 = vunpack.c.l.b16 %v507
    %v555 = vunpack.c.h.b16 %v507
    %v556 = vunpack.c.l.b16 %v508
    %v557 = vunpack.c.h.b16 %v508
    %v558 = vunpack.c.l.b16 %v509
    %v559 = vunpack.c.h.b16 %v509
    %v560 = vunpack.c.l.b16 %v510
    %v561 = vunpack.c.h.b16 %v510
    %v562 = vunpack.c.l.b16 %v511
    %v563 = vunpack.c.h.b16 %v511
    %v564 = vunpack.c.l.b16 %v512
    %v565 = vunpack.c.h.b16 %v512
    %v566 = vunpack.c.l.b16 %v513
    %v567 = vunpack.c.h.b16 %v513
    %v568 = vunpack.c.l.b16 %v514
    %v569 = vunpack.c.h.b16 %v514
    %v570 = vunpack.c.l.b16 %v515
    %v571 = vunpack.c.h.b16 %v515
    %v572 = vunpack.c.l.b16 %v516
    %v573 = vunpack.c.h.b16 %v516
    %v574 = vunpack.c.l.b16 %v517
    %v575 = vunpack.c.h.b16 %v517
    %v576 = vunpack.c.l.b16 %v518
    %v577 = vunpack.c.h.b16 %v518
    %v578 = vunpack.c.l.b16 %v519
    %v579 = vunpack.c.h.b16 %v519
    %v580 = vunpack.c.l.b16 %v520
    %v581 = vunpack.c.h.b16 %v520
    %v582 = vpack.c.b16 %v552, %v550
    %v583 = vpack.c.b16 %v553, %v551
    %v584 = vpack.c.b16 %v556, %v554
    %v585 = vpack.c.b16 %v557, %v555
    %v586 = vpack.c.b16 %v560, %v558
    %v587 = vpack.c.b16 %v561, %v559
    %v588 = vpack.c.b16 %v564, %v562
    %v589 = vpack.c.b16 %v565, %v563
    %v590 = vpack.c.b16 %v568, %v566
    %v591 = vpack.c.b16 %v569, %v567
    %v592 = vpack.c.b16 %v572, %v570
    %v593 = vpack.c.b16 %v573, %v571
    %v594 = vpack.c.b16 %v576, %v574
    %v595 = vpack.c.b16 %v577, %v575
    %v596 = vpack.c.b16 %v580, %v578
    %v597 = vpack.c.b16 %v581, %v579
    %614 = vmatprep.subr.bf16.mxu0 %v583
    %615 = vmatpush1.bf16.msra.mxu0 %v582
    %616 = vmatprep.subr.bf16.mxu0 %v585
    %617 = vmatpush1.bf16.msra.mxu0 %v584
    %618 = vmatprep.subr.bf16.mxu0 %v587
    %619 = vmatpush1.bf16.msra.mxu0 %v586
    %620 = vmatprep.subr.bf16.mxu0 %v589
    %621 = vmatpush1.bf16.msra.mxu0 %v588
    %622 = vmatprep.subr.bf16.mxu0 %v591
    %623 = vmatpush1.bf16.msra.mxu0 %v590
    %624 = vmatprep.subr.bf16.mxu0 %v593
    %625 = vmatpush1.bf16.msra.mxu0 %v592
    %626 = vmatprep.subr.bf16.mxu0 %v595
    %627 = vmatpush1.bf16.msra.mxu0 %v594
    %628 = vmatprep.subr.bf16.mxu0 %v597
    %629 = vmatpush1.bf16.msra.mxu0 %v596
    %630 = vmatprep.subr.bf16.mxu0 0
    %631 = vmatpush1.bf16.msra.mxu0 0
    %632 = vmatprep.subr.bf16.mxu0 0
    %633 = vmatpush1.bf16.msra.mxu0 0
    %634 = vmatprep.subr.bf16.mxu0 0
    %635 = vmatpush1.bf16.msra.mxu0 0
    %636 = vmatprep.subr.bf16.mxu0 0
    %637 = vmatpush1.bf16.msra.mxu0 0
    %638 = vmatprep.subr.bf16.mxu0 0
    %639 = vmatpush1.bf16.msra.mxu0 0
    %640 = vmatprep.subr.bf16.mxu0 0
    %641 = vmatpush1.bf16.msra.mxu0 0
    %642 = vmatprep.subr.bf16.mxu0 0
    %643 = vmatpush1.bf16.msra.mxu0 0
    %644 = vmatprep.subr.bf16.mxu0 0
    %645 = vmatpush1.bf16.msra.mxu0 0
    %646 = vmatprep.mubr.bf16.mxu0 0
    %647 = vmatmul.mubr.bf16.gmra.mrb[0].mxu0 %v503
    %v648 = vpop.f32.mrb[0].mxu0
    %v649 = vadd.f32 %v527, %v648
    %v650 = vpop.f32.mrb[0].mxu0
    %v651 = vadd.f32 %v531, %v650
    %v652 = vpop.f32.mrb[0].mxu0
    %v653 = vpop.f32.mrb[0].mxu0
    %654 = vdwg.mxu0
    %v655 = vmul.f32 %v649, 0.01
    %v656 = vmul.f32 %v651, 0.01
    %v657 = vmax.f32 %v649, %v655
    %v658 = vmax.f32 %v651, %v656
    %v659 = vpack.c.bf16 %v657, %v657
    %v660 = vpack.c.bf16 %v658, %v658
    %s661 = scalar_lea.vmem [#allocation7], 128
    %v662 = vld [vmem:[%s661] sm:$0xf]
    %v663 = vld [vmem:[%s661 + $0x4] sm:$0xf]
    %v664 = vld [vmem:[%s661 + $0x8] sm:$0xf]
    %v665 = vld [vmem:[%s661 + $0xc] sm:$0xf]
    %v666 = vld [vmem:[%s661 + $0x10] sm:$0xf]
    %v667 = vld [vmem:[%s661 + $0x14] sm:$0xf]
    %v668 = vld [vmem:[%s661 + $0x18] sm:$0xf]
    %v669 = vld [vmem:[%s661 + $0x1c] sm:$0xf]
    %v670 = vld [vmem:[%s661 + $0x20] sm:$0xf]
    %v671 = vld [vmem:[%s661 + $0x24] sm:$0xf]
    %v672 = vld [vmem:[%s661 + $0x28] sm:$0xf]
    %v673 = vld [vmem:[%s661 + $0x2c] sm:$0xf]
    %v674 = vld [vmem:[%s661 + $0x30] sm:$0xf]
    %v675 = vld [vmem:[%s661 + $0x34] sm:$0xf]
    %v676 = vld [vmem:[%s661 + $0x38] sm:$0xf]
    %v677 = vld [vmem:[%s661 + $0x3c] sm:$0xf]
    %v678 = vld [vmem:[%s661 + $0x40] sm:$0xf]
    %v679 = vld [vmem:[%s661 + $0x44] sm:$0xf]
    %v680 = vld [vmem:[%s661 + $0x48] sm:$0xf]
    %v681 = vld [vmem:[%s661 + $0x4c] sm:$0xf]
    %v682 = vld [vmem:[%s661 + $0x50] sm:$0xf]
    %v683 = vld [vmem:[%s661 + $0x54] sm:$0xf]
    %v684 = vld [vmem:[%s661 + $0x58] sm:$0xf]
    %v685 = vld [vmem:[%s661 + $0x5c] sm:$0xf]
    %v686 = vld [vmem:[%s661 + $0x60] sm:$0xf]
    %v687 = vld [vmem:[%s661 + $0x64] sm:$0xf]
    %v688 = vld [vmem:[%s661 + $0x68] sm:$0xf]
    %v689 = vld [vmem:[%s661 + $0x6c] sm:$0xf]
    %v690 = vld [vmem:[%s661 + $0x70] sm:$0xf]
    %v691 = vld [vmem:[%s661 + $0x74] sm:$0xf]
    %v692 = vld [vmem:[%s661 + $0x78] sm:$0xf]
    %v693 = vld [vmem:[%s661 + $0x7c] sm:$0xf]
    %v694 = vld [vmem:[%s8 + $0x1] sm:$0x1]
    %v695 = vlaneseq
    %v696 = vshrl.u32 %v695, 7
    %v697 = vsub.s32 0, %v696
    %v698 = vrot.slane %v694, %v697
    %v731 = vunpack.c.l.b16 %v662
    %v732 = vunpack.c.l.b16 %v663
    %v733 = vunpack.c.l.b16 %v664
    %v734 = vunpack.c.l.b16 %v665
    %v735 = vunpack.c.l.b16 %v666
    %v736 = vunpack.c.l.b16 %v667
    %v737 = vunpack.c.l.b16 %v668
    %v738 = vunpack.c.l.b16 %v669
    %v739 = vunpack.c.l.b16 %v670
    %v740 = vunpack.c.l.b16 %v671
    %v741 = vunpack.c.l.b16 %v672
    %v742 = vunpack.c.l.b16 %v673
    %v743 = vunpack.c.l.b16 %v674
    %v744 = vunpack.c.l.b16 %v675
    %v745 = vunpack.c.l.b16 %v676
    %v746 = vunpack.c.l.b16 %v677
    %v747 = vunpack.c.l.b16 %v678
    %v748 = vunpack.c.l.b16 %v679
    %v749 = vunpack.c.l.b16 %v680
    %v750 = vunpack.c.l.b16 %v681
    %v751 = vunpack.c.l.b16 %v682
    %v752 = vunpack.c.l.b16 %v683
    %v753 = vunpack.c.l.b16 %v684
    %v754 = vunpack.c.l.b16 %v685
    %v755 = vunpack.c.l.b16 %v686
    %v756 = vunpack.c.l.b16 %v687
    %v757 = vunpack.c.l.b16 %v688
    %v758 = vunpack.c.l.b16 %v689
    %v759 = vunpack.c.l.b16 %v690
    %v760 = vunpack.c.l.b16 %v691
    %v761 = vunpack.c.l.b16 %v692
    %v762 = vunpack.c.l.b16 %v693
    %v763 = vpack.c.b16 %v732, %v731
    %v764 = vpack.c.b16 %v734, %v733
    %v765 = vpack.c.b16 %v736, %v735
    %v766 = vpack.c.b16 %v738, %v737
    %v767 = vpack.c.b16 %v740, %v739
    %v768 = vpack.c.b16 %v742, %v741
    %v769 = vpack.c.b16 %v744, %v743
    %v770 = vpack.c.b16 %v746, %v745
    %v771 = vpack.c.b16 %v748, %v747
    %v772 = vpack.c.b16 %v750, %v749
    %v773 = vpack.c.b16 %v752, %v751
    %v774 = vpack.c.b16 %v754, %v753
    %v775 = vpack.c.b16 %v756, %v755
    %v776 = vpack.c.b16 %v758, %v757
    %v777 = vpack.c.b16 %v760, %v759
    %v778 = vpack.c.b16 %v762, %v761
    %795 = vmatprep.subr.bf16.mxu0 0
    %796 = vmatpush1.bf16.msra.mxu0 %v763
    %797 = vmatprep.subr.bf16.mxu0 0
    %798 = vmatpush1.bf16.msra.mxu0 %v764
    %799 = vmatprep.subr.bf16.mxu0 0
    %800 = vmatpush1.bf16.msra.mxu0 %v765
    %801 = vmatprep.subr.bf16.mxu0 0
    %802 = vmatpush1.bf16.msra.mxu0 %v766
    %803 = vmatprep.subr.bf16.mxu0 0
    %804 = vmatpush1.bf16.msra.mxu0 %v767
    %805 = vmatprep.subr.bf16.mxu0 0
    %806 = vmatpush1.bf16.msra.mxu0 %v768
    %807 = vmatprep.subr.bf16.mxu0 0
    %808 = vmatpush1.bf16.msra.mxu0 %v769
    %809 = vmatprep.subr.bf16.mxu0 0
    %810 = vmatpush1.bf16.msra.mxu0 %v770
    %811 = vmatprep.subr.bf16.mxu0 0
    %812 = vmatpush1.bf16.msra.mxu0 %v771
    %813 = vmatprep.subr.bf16.mxu0 0
    %814 = vmatpush1.bf16.msra.mxu0 %v772
    %815 = vmatprep.subr.bf16.mxu0 0
    %816 = vmatpush1.bf16.msra.mxu0 %v773
    %817 = vmatprep.subr.bf16.mxu0 0
    %818 = vmatpush1.bf16.msra.mxu0 %v774
    %819 = vmatprep.subr.bf16.mxu0 0
    %820 = vmatpush1.bf16.msra.mxu0 %v775
    %821 = vmatprep.subr.bf16.mxu0 0
    %822 = vmatpush1.bf16.msra.mxu0 %v776
    %823 = vmatprep.subr.bf16.mxu0 0
    %824 = vmatpush1.bf16.msra.mxu0 %v777
    %825 = vmatprep.subr.bf16.mxu0 0
    %826 = vmatpush1.bf16.msra.mxu0 %v778
    %827 = vmatprep.mubr.bf16.mxu0 %v660
    %828 = vmatmul.mubr.bf16.gmra.mrb[0].mxu0 %v659
    %v829 = vpop.f32.mrb[0].mxu0
    %v830 = vadd.f32 %v698, %v829
    %v831 = vpop.f32.mrb[0].mxu0
    %v832 = vpop.f32.mrb[0].mxu0
    %v833 = vpop.f32.mrb[0].mxu0
    %834 = vdwg.mxu0
    %v835 = vmul.f32 %v830, 0.01
    %v836 = vmax.f32 %v830, %v835
    %v837 = vpack.c.bf16 %v836, %v836
    %v838 = vld [vmem:[#allocation10] sm:$0xf]
    %v839 = vld [vmem:[#allocation10 + $0x4] sm:$0xf]
    %v840 = vld [vmem:[#allocation10 + $0x8] sm:$0xf]
    %v841 = vld [vmem:[#allocation10 + $0xc] sm:$0xf]
    %v842 = vld [vmem:[#allocation10 + $0x10] sm:$0xf]
    %v843 = vld [vmem:[#allocation10 + $0x14] sm:$0xf]
    %v844 = vld [vmem:[#allocation10 + $0x18] sm:$0xf]
    %v845 = vld [vmem:[#allocation10 + $0x1c] sm:$0xf]
    %v846 = vld [vmem:[#allocation10 + $0x20] sm:$0xf]
    %v847 = vld [vmem:[#allocation10 + $0x24] sm:$0xf]
    %v848 = vld [vmem:[#allocation10 + $0x28] sm:$0xf]
    %v849 = vld [vmem:[#allocation10 + $0x2c] sm:$0xf]
    %v850 = vld [vmem:[#allocation10 + $0x30] sm:$0xf]
    %v851 = vld [vmem:[#allocation10 + $0x34] sm:$0xf]
    %v852 = vld [vmem:[#allocation10 + $0x38] sm:$0xf]
    %v853 = vld [vmem:[#allocation10 + $0x3c] sm:$0xf]
    %v870 = vunpack.c.l.b16 %v838
    %v871 = vunpack.c.l.b16 %v839
    %v872 = vunpack.c.l.b16 %v840
    %v873 = vunpack.c.l.b16 %v841
    %v874 = vunpack.c.l.b16 %v842
    %v875 = vunpack.c.l.b16 %v843
    %v876 = vunpack.c.l.b16 %v844
    %v877 = vunpack.c.l.b16 %v845
    %v878 = vunpack.c.l.b16 %v846
    %v879 = vunpack.c.l.b16 %v847
    %v880 = vunpack.c.l.b16 %v848
    %v881 = vunpack.c.l.b16 %v849
    %v882 = vunpack.c.l.b16 %v850
    %v883 = vunpack.c.l.b16 %v851
    %v884 = vunpack.c.l.b16 %v852
    %v885 = vunpack.c.l.b16 %v853
    %v886 = vpack.c.b16 %v871, %v870
    %v887 = vpack.c.b16 %v873, %v872
    %v888 = vpack.c.b16 %v875, %v874
    %v889 = vpack.c.b16 %v877, %v876
    %v890 = vpack.c.b16 %v879, %v878
    %v891 = vpack.c.b16 %v881, %v880
    %v892 = vpack.c.b16 %v883, %v882
    %v893 = vpack.c.b16 %v885, %v884
    %902 = vmatprep.subr.bf16.mxu0 0
    %903 = vmatpush1.bf16.msra.mxu0 %v886
    %904 = vmatprep.subr.bf16.mxu0 0
    %905 = vmatpush1.bf16.msra.mxu0 %v887
    %906 = vmatprep.subr.bf16.mxu0 0
    %907 = vmatpush1.bf16.msra.mxu0 %v888
    %908 = vmatprep.subr.bf16.mxu0 0
    %909 = vmatpush1.bf16.msra.mxu0 %v889
    %910 = vmatprep.subr.bf16.mxu0 0
    %911 = vmatpush1.bf16.msra.mxu0 %v890
    %912 = vmatprep.subr.bf16.mxu0 0
    %913 = vmatpush1.bf16.msra.mxu0 %v891
    %914 = vmatprep.subr.bf16.mxu0 0
    %915 = vmatpush1.bf16.msra.mxu0 %v892
    %916 = vmatprep.subr.bf16.mxu0 0
    %917 = vmatpush1.bf16.msra.mxu0 %v893
    %918 = vmatprep.subr.bf16.mxu0 0
    %919 = vmatpush1.bf16.msra.mxu0 0
    %920 = vmatprep.subr.bf16.mxu0 0
    %921 = vmatpush1.bf16.msra.mxu0 0
    %922 = vmatprep.subr.bf16.mxu0 0
    %923 = vmatpush1.bf16.msra.mxu0 0
    %924 = vmatprep.subr.bf16.mxu0 0
    %925 = vmatpush1.bf16.msra.mxu0 0
    %926 = vmatprep.subr.bf16.mxu0 0
    %927 = vmatpush1.bf16.msra.mxu0 0
    %928 = vmatprep.subr.bf16.mxu0 0
    %929 = vmatpush1.bf16.msra.mxu0 0
    %930 = vmatprep.subr.bf16.mxu0 0
    %931 = vmatpush1.bf16.msra.mxu0 0
    %932 = vmatprep.subr.bf16.mxu0 0
    %933 = vmatpush1.bf16.msra.mxu0 0
    %934 = vmatprep.mubr.bf16.mxu0 0
    %935 = vmatmul.mubr.bf16.gmra.mrb[0].mxu0 %v837
    %v936 = vpop.f32.mrb[0].mxu0
    %v937 = vadd.f32 0.0, %v936
    %v938 = vpop.f32.mrb[0].mxu0
    %v939 = vpop.f32.mrb[0].mxu0
    %v940 = vpop.f32.mrb[0].mxu0
    %941 = vdwg.mxu0
    %v942 = vpack.c.bf16 %v937, %v937
    %v945 = vunpack.c.l.b16 %v109
    %v946 = vunpack.c.l.b16 %v110
    %v947 = vpack.c.b16 %v946, %v945
    %vm948 = vcmask 64512
    %v950 = vsel %vm948, %v947, 0
    %vm952 = vcmask 1043456
    %v954 = vsel %vm952, %v942, 0
    %956 = vmatprep.subr.bf16.mxu0 0
    %957 = vmatpush1.bf16.msra.mxu0 %v954
    %958 = vmatprep.subr.bf16.mxu0 0
    %959 = vmatpush1.bf16.msra.mxu0 0
    %960 = vmatprep.subr.bf16.mxu0 0
    %961 = vmatpush1.bf16.msra.mxu0 0
    %962 = vmatprep.subr.bf16.mxu0 0
    %963 = vmatpush1.bf16.msra.mxu0 0
    %964 = vmatprep.subr.bf16.mxu0 0
    %965 = vmatpush1.bf16.msra.mxu0 0
    %966 = vmatprep.subr.bf16.mxu0 0
    %967 = vmatpush1.bf16.msra.mxu0 0
    %968 = vmatprep.subr.bf16.mxu0 0
    %969 = vmatpush1.bf16.msra.mxu0 0
    %970 = vmatprep.subr.bf16.mxu0 0
    %971 = vmatpush1.bf16.msra.mxu0 0
    %972 = vmatprep.subr.bf16.mxu0 0
    %973 = vmatpush1.bf16.msra.mxu0 0
    %974 = vmatprep.subr.bf16.mxu0 0
    %975 = vmatpush1.bf16.msra.mxu0 0
    %976 = vmatprep.subr.bf16.mxu0 0
    %977 = vmatpush1.bf16.msra.mxu0 0
    %978 = vmatprep.subr.bf16.mxu0 0
    %979 = vmatpush1.bf16.msra.mxu0 0
    %980 = vmatprep.subr.bf16.mxu0 0
    %981 = vmatpush1.bf16.msra.mxu0 0
    %982 = vmatprep.subr.bf16.mxu0 0
    %983 = vmatpush1.bf16.msra.mxu0 0
    %984 = vmatprep.subr.bf16.mxu0 0
    %985 = vmatpush1.bf16.msra.mxu0 0
    %986 = vmatprep.subr.bf16.mxu0 0
    %987 = vmatpush1.bf16.msra.mxu0 0
    %988 = vmatprep.mubr.bf16.mxu0 0
    %989 = vmatmul.mubr.bf16.gmra.mrb[0].mxu0 %v950
    %v990 = vpop.f32.mrb[0].mxu0
    %v991 = vadd.f32 0.0, %v990
    %v992 = vpop.f32.mrb[0].mxu0
    %v993 = vpop.f32.mrb[0].mxu0
    %v994 = vadd.f32 0.0, %v993
    %v995 = vpop.f32.mrb[0].mxu0
    %996 = vdwg.mxu0
    %v997 = vld [vmem:[#allocation8] sm:$0xf]
    %v998 = vld [vmem:[#allocation8 + $0x4] sm:$0xf]
    %v999 = vld [vmem:[#allocation8 + $0x8] sm:$0xf]
    %v1000 = vld [vmem:[#allocation8 + $0xc] sm:$0xf]
    %v1001 = vld [vmem:[#allocation8 + $0x10] sm:$0xf]
    %v1002 = vld [vmem:[#allocation8 + $0x14] sm:$0xf]
    %v1003 = vld [vmem:[#allocation8 + $0x18] sm:$0xf]
    %v1004 = vld [vmem:[#allocation8 + $0x1c] sm:$0xf]
    %v1005 = vld [vmem:[#allocation8 + $0x20] sm:$0xf]
    %v1006 = vld [vmem:[#allocation8 + $0x24] sm:$0xf]
    %v1007 = vld [vmem:[#allocation8 + $0x28] sm:$0xf]
    %v1008 = vld [vmem:[#allocation8 + $0x2c] sm:$0xf]
    %v1009 = vld [vmem:[#allocation8 + $0x30] sm:$0xf]
    %v1010 = vld [vmem:[#allocation8 + $0x34] sm:$0xf]
    %v1011 = vld [vmem:[#allocation8 + $0x38] sm:$0xf]
    %v1012 = vld [vmem:[#allocation8 + $0x3c] sm:$0xf]
    %v1029 = vunpack.c.l.b16 %v997
    %v1030 = vunpack.c.l.b16 %v998
    %v1031 = vunpack.c.l.b16 %v999
    %v1032 = vunpack.c.l.b16 %v1000
    %v1033 = vunpack.c.l.b16 %v1001
    %v1034 = vunpack.c.l.b16 %v1002
    %v1035 = vunpack.c.l.b16 %v1003
    %v1036 = vunpack.c.l.b16 %v1004
    %v1037 = vunpack.c.l.b16 %v1005
    %v1038 = vunpack.c.l.b16 %v1006
    %v1039 = vunpack.c.l.b16 %v1007
    %v1040 = vunpack.c.l.b16 %v1008
    %v1041 = vunpack.c.l.b16 %v1009
    %v1042 = vunpack.c.l.b16 %v1010
    %v1043 = vunpack.c.l.b16 %v1011
    %v1044 = vunpack.c.l.b16 %v1012
    %v1045 = vpack.c.b16 %v1030, %v1029
    %v1046 = vpack.c.b16 %v1032, %v1031
    %v1047 = vpack.c.b16 %v1034, %v1033
    %v1048 = vpack.c.b16 %v1036, %v1035
    %v1049 = vpack.c.b16 %v1038, %v1037
    %v1050 = vpack.c.b16 %v1040, %v1039
    %v1051 = vpack.c.b16 %v1042, %v1041
    %v1052 = vpack.c.b16 %v1044, %v1043
    %1061 = vmatprep.subr.bf16.mxu0 0
    %1062 = vmatpush1.bf16.msra.mxu0 %v1045
    %1063 = vmatprep.subr.bf16.mxu0 0
    %1064 = vmatpush1.bf16.msra.mxu0 %v1046
    %1065 = vmatprep.subr.bf16.mxu0 0
    %1066 = vmatpush1.bf16.msra.mxu0 %v1047
    %1067 = vmatprep.subr.bf16.mxu0 0
    %1068 = vmatpush1.bf16.msra.mxu0 %v1048
    %1069 = vmatprep.subr.bf16.mxu0 0
    %1070 = vmatpush1.bf16.msra.mxu0 %v1049
    %1071 = vmatprep.subr.bf16.mxu0 0
    %1072 = vmatpush1.bf16.msra.mxu0 %v1050
    %1073 = vmatprep.subr.bf16.mxu0 0
    %1074 = vmatpush1.bf16.msra.mxu0 %v1051
    %1075 = vmatprep.subr.bf16.mxu0 0
    %1076 = vmatpush1.bf16.msra.mxu0 %v1052
    %1077 = vmatprep.subr.bf16.mxu0 0
    %1078 = vmatpush1.bf16.msra.mxu0 0
    %1079 = vmatprep.subr.bf16.mxu0 0
    %1080 = vmatpush1.bf16.msra.mxu0 0
    %1081 = vmatprep.subr.bf16.mxu0 0
    %1082 = vmatpush1.bf16.msra.mxu0 0
    %1083 = vmatprep.subr.bf16.mxu0 0
    %1084 = vmatpush1.bf16.msra.mxu0 0
    %1085 = vmatprep.subr.bf16.mxu0 0
    %1086 = vmatpush1.bf16.msra.mxu0 0
    %1087 = vmatprep.subr.bf16.mxu0 0
    %1088 = vmatpush1.bf16.msra.mxu0 0
    %1089 = vmatprep.subr.bf16.mxu0 0
    %1090 = vmatpush1.bf16.msra.mxu0 0
    %1091 = vmatprep.subr.bf16.mxu0 0
    %1092 = vmatpush1.bf16.msra.mxu0 0
    %1093 = vmatprep.mubr.bf16.mxu0 0
    %1094 = vmatmul.mubr.bf16.gmra.mrb[0].mxu0 %v452
    %v1095 = vpop.f32.mrb[0].mxu0
    %v1096 = vadd.f32 %v991, %v1095
    %v1097 = vpop.f32.mrb[0].mxu0
    %v1098 = vpop.f32.mrb[0].mxu0
    %v1099 = vadd.f32 %v994, %v1098
    %v1100 = vpop.f32.mrb[0].mxu0
    %1101 = vdwg.mxu0
    %v1102 = vld [vmem:[%s8 + $0x2] sm:$0x1]
    %v1103 = vlaneseq
    %v1104 = vshrl.u32 %v1103, 7
    %v1105 = vsub.s32 0, %v1104
    %v1106 = vrot.slane %v1102, %v1105
    %v1107 = vadd.f32 %v1096, %v1106
    %v1108 = vadd.f32 %v1099, %v1106
    %v1109 = vmul.f32 %v1107, 0.01
    %v1110 = vmul.f32 %v1108, 0.01
    %v1111 = vmax.f32 %v1107, %v1109
    %v1112 = vmax.f32 %v1108, %v1110
    %v1113 = vadd.f32 %v1111, %v106
    %v1114 = vadd.f32 %v1112, %v107
    %v1115 = vpack.c.bf16 %v1114, %v1113
    %s1116 = scalar_lea.vmem [#allocation5], 256
    %v1117 = vld [vmem:[%s1116] sm:$0xff]
    %v1118 = vld [vmem:[%s1116 + $0x8] sm:$0xff]
    %v1119 = vld [vmem:[%s1116 + $0x10] sm:$0xff]
    %v1120 = vld [vmem:[%s1116 + $0x18] sm:$0xff]
    %v1121 = vld [vmem:[%s1116 + $0x20] sm:$0xff]
    %v1122 = vld [vmem:[%s1116 + $0x28] sm:$0xff]
    %v1123 = vld [vmem:[%s1116 + $0x30] sm:$0xff]
    %v1124 = vld [vmem:[%s1116 + $0x38] sm:$0xff]
    %v1125 = vld [vmem:[%s1116 + $0x40] sm:$0xff]
    %v1126 = vld [vmem:[%s1116 + $0x48] sm:$0xff]
    %v1127 = vld [vmem:[%s1116 + $0x50] sm:$0xff]
    %v1128 = vld [vmem:[%s1116 + $0x58] sm:$0xff]
    %v1129 = vld [vmem:[%s1116 + $0x60] sm:$0xff]
    %v1130 = vld [vmem:[%s1116 + $0x68] sm:$0xff]
    %v1131 = vld [vmem:[%s1116 + $0x70] sm:$0xff]
    %v1132 = vld [vmem:[%s1116 + $0x78] sm:$0xff]
    %s1133 = scalar_lea.vmem %s6, 2
    %v1134 = vld [vmem:[%s1133] ss:$8 sm:$0x3]
    %v1136 = vlaneseq
    %v1137 = vshrl.u32 %v1136, 7
    %v1138 = vsub.s32 0, %v1137
    %v1139 = vrot.slane %v1134, %v1138
    %v1140 = vlaneseq
    %v1141 = vshrl.u32 %v1140, 7
    %v1142 = vsub.s32 1, %v1141
    %v1143 = vrot.slane %v1134, %v1142
    %v1162 = vunpack.c.l.b16 %v1117
    %v1163 = vunpack.c.h.b16 %v1117
    %v1164 = vunpack.c.l.b16 %v1118
    %v1165 = vunpack.c.h.b16 %v1118
    %v1166 = vunpack.c.l.b16 %v1119
    %v1167 = vunpack.c.h.b16 %v1119
    %v1168 = vunpack.c.l.b16 %v1120
    %v1169 = vunpack.c.h.b16 %v1120
    %v1170 = vunpack.c.l.b16 %v1121
    %v1171 = vunpack.c.h.b16 %v1121
    %v1172 = vunpack.c.l.b16 %v1122
    %v1173 = vunpack.c.h.b16 %v1122
    %v1174 = vunpack.c.l.b16 %v1123
    %v1175 = vunpack.c.h.b16 %v1123
    %v1176 = vunpack.c.l.b16 %v1124
    %v1177 = vunpack.c.h.b16 %v1124
    %v1178 = vunpack.c.l.b16 %v1125
    %v1179 = vunpack.c.h.b16 %v1125
    %v1180 = vunpack.c.l.b16 %v1126
    %v1181 = vunpack.c.h.b16 %v1126
    %v1182 = vunpack.c.l.b16 %v1127
    %v1183 = vunpack.c.h.b16 %v1127
    %v1184 = vunpack.c.l.b16 %v1128
    %v1185 = vunpack.c.h.b16 %v1128
    %v1186 = vunpack.c.l.b16 %v1129
    %v1187 = vunpack.c.h.b16 %v1129
    %v1188 = vunpack.c.l.b16 %v1130
    %v1189 = vunpack.c.h.b16 %v1130
    %v1190 = vunpack.c.l.b16 %v1131
    %v1191 = vunpack.c.h.b16 %v1131
    %v1192 = vunpack.c.l.b16 %v1132
    %v1193 = vunpack.c.h.b16 %v1132
    %v1194 = vpack.c.b16 %v1164, %v1162
    %v1195 = vpack.c.b16 %v1165, %v1163
    %v1196 = vpack.c.b16 %v1168, %v1166
    %v1197 = vpack.c.b16 %v1169, %v1167
    %v1198 = vpack.c.b16 %v1172, %v1170
    %v1199 = vpack.c.b16 %v1173, %v1171
    %v1200 = vpack.c.b16 %v1176, %v1174
    %v1201 = vpack.c.b16 %v1177, %v1175
    %v1202 = vpack.c.b16 %v1180, %v1178
    %v1203 = vpack.c.b16 %v1181, %v1179
    %v1204 = vpack.c.b16 %v1184, %v1182
    %v1205 = vpack.c.b16 %v1185, %v1183
    %v1206 = vpack.c.b16 %v1188, %v1186
    %v1207 = vpack.c.b16 %v1189, %v1187
    %v1208 = vpack.c.b16 %v1192, %v1190
    %v1209 = vpack.c.b16 %v1193, %v1191
    %1226 = vmatprep.subr.bf16.mxu0 %v1195
    %1227 = vmatpush1.bf16.msra.mxu0 %v1194
    %1228 = vmatprep.subr.bf16.mxu0 %v1197
    %1229 = vmatpush1.bf16.msra.mxu0 %v1196
    %1230 = vmatprep.subr.bf16.mxu0 %v1199
    %1231 = vmatpush1.bf16.msra.mxu0 %v1198
    %1232 = vmatprep.subr.bf16.mxu0 %v1201
    %1233 = vmatpush1.bf16.msra.mxu0 %v1200
    %1234 = vmatprep.subr.bf16.mxu0 %v1203
    %1235 = vmatpush1.bf16.msra.mxu0 %v1202
    %1236 = vmatprep.subr.bf16.mxu0 %v1205
    %1237 = vmatpush1.bf16.msra.mxu0 %v1204
    %1238 = vmatprep.subr.bf16.mxu0 %v1207
    %1239 = vmatpush1.bf16.msra.mxu0 %v1206
    %1240 = vmatprep.subr.bf16.mxu0 %v1209
    %1241 = vmatpush1.bf16.msra.mxu0 %v1208
    %1242 = vmatprep.subr.bf16.mxu0 0
    %1243 = vmatpush1.bf16.msra.mxu0 0
    %1244 = vmatprep.subr.bf16.mxu0 0
    %1245 = vmatpush1.bf16.msra.mxu0 0
    %1246 = vmatprep.subr.bf16.mxu0 0
    %1247 = vmatpush1.bf16.msra.mxu0 0
    %1248 = vmatprep.subr.bf16.mxu0 0
    %1249 = vmatpush1.bf16.msra.mxu0 0
    %1250 = vmatprep.subr.bf16.mxu0 0
    %1251 = vmatpush1.bf16.msra.mxu0 0
    %1252 = vmatprep.subr.bf16.mxu0 0
    %1253 = vmatpush1.bf16.msra.mxu0 0
    %1254 = vmatprep.subr.bf16.mxu0 0
    %1255 = vmatpush1.bf16.msra.mxu0 0
    %1256 = vmatprep.subr.bf16.mxu0 0
    %1257 = vmatpush1.bf16.msra.mxu0 0
    %1258 = vmatprep.mubr.bf16.mxu0 0
    %1259 = vmatmul.mubr.bf16.gmra.mrb[0].mxu0 %v1115
    %v1260 = vpop.f32.mrb[0].mxu0
    %v1261 = vadd.f32 %v1139, %v1260
    %v1262 = vpop.f32.mrb[0].mxu0
    %v1263 = vadd.f32 %v1143, %v1262
    %v1264 = vpop.f32.mrb[0].mxu0
    %v1265 = vadd.f32 %v1139, %v1264
    %v1266 = vpop.f32.mrb[0].mxu0
    %v1267 = vadd.f32 %v1143, %v1266
    %1268 = vdwg.mxu0
    %v1269 = vmul.f32 %v1261, 0.01
    %v1270 = vmul.f32 %v1263, 0.01
    %v1271 = vmul.f32 %v1265, 0.01
    %v1272 = vmul.f32 %v1267, 0.01
    %v1273 = vmax.f32 %v1261, %v1269
    %v1274 = vmax.f32 %v1263, %v1270
    %v1275 = vmax.f32 %v1265, %v1271
    %v1276 = vmax.f32 %v1267, %v1272
    %v1277 = vpack.c.bf16 %v1275, %v1273
    %v1278 = vpack.c.bf16 %v1276, %v1274
    %s1279 = scalar_lea.vmem [#allocation7], 256
    %v1280 = vld [vmem:[%s1279] sm:$0xf]
    %v1281 = vld [vmem:[%s1279 + $0x4] sm:$0xf]
    %v1282 = vld [vmem:[%s1279 + $0x8] sm:$0xf]
    %v1283 = vld [vmem:[%s1279 + $0xc] sm:$0xf]
    %v1284 = vld [vmem:[%s1279 + $0x10] sm:$0xf]
    %v1285 = vld [vmem:[%s1279 + $0x14] sm:$0xf]
    %v1286 = vld [vmem:[%s1279 + $0x18] sm:$0xf]
    %v1287 = vld [vmem:[%s1279 + $0x1c] sm:$0xf]
    %v1288 = vld [vmem:[%s1279 + $0x20] sm:$0xf]
    %v1289 = vld [vmem:[%s1279 + $0x24] sm:$0xf]
    %v1290 = vld [vmem:[%s1279 + $0x28] sm:$0xf]
    %v1291 = vld [vmem:[%s1279 + $0x2c] sm:$0xf]
    %v1292 = vld [vmem:[%s1279 + $0x30] sm:$0xf]
    %v1293 = vld [vmem:[%s1279 + $0x34] sm:$0xf]
    %v1294 = vld [vmem:[%s1279 + $0x38] sm:$0xf]
    %v1295 = vld [vmem:[%s1279 + $0x3c] sm:$0xf]
    %v1296 = vld [vmem:[%s1279 + $0x40] sm:$0xf]
    %v1297 = vld [vmem:[%s1279 + $0x44] sm:$0xf]
    %v1298 = vld [vmem:[%s1279 + $0x48] sm:$0xf]
    %v1299 = vld [vmem:[%s1279 + $0x4c] sm:$0xf]
    %v1300 = vld [vmem:[%s1279 + $0x50] sm:$0xf]
    %v1301 = vld [vmem:[%s1279 + $0x54] sm:$0xf]
    %v1302 = vld [vmem:[%s1279 + $0x58] sm:$0xf]
    %v1303 = vld [vmem:[%s1279 + $0x5c] sm:$0xf]
    %v1304 = vld [vmem:[%s1279 + $0x60] sm:$0xf]
    %v1305 = vld [vmem:[%s1279 + $0x64] sm:$0xf]
    %v1306 = vld [vmem:[%s1279 + $0x68] sm:$0xf]
    %v1307 = vld [vmem:[%s1279 + $0x6c] sm:$0xf]
    %v1308 = vld [vmem:[%s1279 + $0x70] sm:$0xf]
    %v1309 = vld [vmem:[%s1279 + $0x74] sm:$0xf]
    %v1310 = vld [vmem:[%s1279 + $0x78] sm:$0xf]
    %v1311 = vld [vmem:[%s1279 + $0x7c] sm:$0xf]
    %v1312 = vld [vmem:[%s8 + $0x3] sm:$0x1]
    %v1313 = vlaneseq
    %v1314 = vshrl.u32 %v1313, 7
    %v1315 = vsub.s32 0, %v1314
    %v1316 = vrot.slane %v1312, %v1315
    %v1349 = vunpack.c.l.b16 %v1280
    %v1350 = vunpack.c.l.b16 %v1281
    %v1351 = vunpack.c.l.b16 %v1282
    %v1352 = vunpack.c.l.b16 %v1283
    %v1353 = vunpack.c.l.b16 %v1284
    %v1354 = vunpack.c.l.b16 %v1285
    %v1355 = vunpack.c.l.b16 %v1286
    %v1356 = vunpack.c.l.b16 %v1287
    %v1357 = vunpack.c.l.b16 %v1288
    %v1358 = vunpack.c.l.b16 %v1289
    %v1359 = vunpack.c.l.b16 %v1290
    %v1360 = vunpack.c.l.b16 %v1291
    %v1361 = vunpack.c.l.b16 %v1292
    %v1362 = vunpack.c.l.b16 %v1293
    %v1363 = vunpack.c.l.b16 %v1294
    %v1364 = vunpack.c.l.b16 %v1295
    %v1365 = vunpack.c.l.b16 %v1296
    %v1366 = vunpack.c.l.b16 %v1297
    %v1367 = vunpack.c.l.b16 %v1298
    %v1368 = vunpack.c.l.b16 %v1299
    %v1369 = vunpack.c.l.b16 %v1300
    %v1370 = vunpack.c.l.b16 %v1301
    %v1371 = vunpack.c.l.b16 %v1302
    %v1372 = vunpack.c.l.b16 %v1303
    %v1373 = vunpack.c.l.b16 %v1304
    %v1374 = vunpack.c.l.b16 %v1305
    %v1375 = vunpack.c.l.b16 %v1306
    %v1376 = vunpack.c.l.b16 %v1307
    %v1377 = vunpack.c.l.b16 %v1308
    %v1378 = vunpack.c.l.b16 %v1309
    %v1379 = vunpack.c.l.b16 %v1310
    %v1380 = vunpack.c.l.b16 %v1311
    %v1381 = vpack.c.b16 %v1350, %v1349
    %v1382 = vpack.c.b16 %v1352, %v1351
    %v1383 = vpack.c.b16 %v1354, %v1353
    %v1384 = vpack.c.b16 %v1356, %v1355
    %v1385 = vpack.c.b16 %v1358, %v1357
    %v1386 = vpack.c.b16 %v1360, %v1359
    %v1387 = vpack.c.b16 %v1362, %v1361
    %v1388 = vpack.c.b16 %v1364, %v1363
    %v1389 = vpack.c.b16 %v1366, %v1365
    %v1390 = vpack.c.b16 %v1368, %v1367
    %v1391 = vpack.c.b16 %v1370, %v1369
    %v1392 = vpack.c.b16 %v1372, %v1371
    %v1393 = vpack.c.b16 %v1374, %v1373
    %v1394 = vpack.c.b16 %v1376, %v1375
    %v1395 = vpack.c.b16 %v1378, %v1377
    %v1396 = vpack.c.b16 %v1380, %v1379
    %1413 = vmatprep.subr.bf16.mxu0 0
    %1414 = vmatpush1.bf16.msra.mxu0 %v1381
    %1415 = vmatprep.subr.bf16.mxu0 0
    %1416 = vmatpush1.bf16.msra.mxu0 %v1382
    %1417 = vmatprep.subr.bf16.mxu0 0
    %1418 = vmatpush1.bf16.msra.mxu0 %v1383
    %1419 = vmatprep.subr.bf16.mxu0 0
    %1420 = vmatpush1.bf16.msra.mxu0 %v1384
    %1421 = vmatprep.subr.bf16.mxu0 0
    %1422 = vmatpush1.bf16.msra.mxu0 %v1385
    %1423 = vmatprep.subr.bf16.mxu0 0
    %1424 = vmatpush1.bf16.msra.mxu0 %v1386
    %1425 = vmatprep.subr.bf16.mxu0 0
    %1426 = vmatpush1.bf16.msra.mxu0 %v1387
    %1427 = vmatprep.subr.bf16.mxu0 0
    %1428 = vmatpush1.bf16.msra.mxu0 %v1388
    %1429 = vmatprep.subr.bf16.mxu0 0
    %1430 = vmatpush1.bf16.msra.mxu0 %v1389
    %1431 = vmatprep.subr.bf16.mxu0 0
    %1432 = vmatpush1.bf16.msra.mxu0 %v1390
    %1433 = vmatprep.subr.bf16.mxu0 0
    %1434 = vmatpush1.bf16.msra.mxu0 %v1391
    %1435 = vmatprep.subr.bf16.mxu0 0
    %1436 = vmatpush1.bf16.msra.mxu0 %v1392
    %1437 = vmatprep.subr.bf16.mxu0 0
    %1438 = vmatpush1.bf16.msra.mxu0 %v1393
    %1439 = vmatprep.subr.bf16.mxu0 0
    %1440 = vmatpush1.bf16.msra.mxu0 %v1394
    %1441 = vmatprep.subr.bf16.mxu0 0
    %1442 = vmatpush1.bf16.msra.mxu0 %v1395
    %1443 = vmatprep.subr.bf16.mxu0 0
    %1444 = vmatpush1.bf16.msra.mxu0 %v1396
    %1445 = vmatprep.mubr.bf16.mxu0 %v1278
    %1446 = vmatmul.mubr.bf16.gmra.mrb[0].mxu0 %v1277
    %v1447 = vpop.f32.mrb[0].mxu0
    %v1448 = vadd.f32 %v1316, %v1447
    %v1449 = vpop.f32.mrb[0].mxu0
    %v1450 = vpop.f32.mrb[0].mxu0
    %v1451 = vadd.f32 %v1316, %v1450
    %v1452 = vpop.f32.mrb[0].mxu0
    %1453 = vdwg.mxu0
    %v1454 = vmul.f32 %v1448, 0.01
    %v1455 = vmul.f32 %v1451, 0.01
    %v1456 = vmax.f32 %v1448, %v1454
    %v1457 = vmax.f32 %v1451, %v1455
    %v1458 = vpack.c.bf16 %v1457, %v1456
    %1459 = vmatprep.subr.bf16.mxu0 0
    %1460 = vmatpush1.bf16.msra.mxu0 %v1458
    %1461 = vmatprep.subr.bf16.mxu0 0
    %1462 = vmatpush1.bf16.msra.mxu0 0
    %1463 = vmatprep.subr.bf16.mxu0 0
    %1464 = vmatpush1.bf16.msra.mxu0 0
    %1465 = vmatprep.subr.bf16.mxu0 0
    %1466 = vmatpush1.bf16.msra.mxu0 0
    %1467 = vmatprep.subr.bf16.mxu0 0
    %1468 = vmatpush1.bf16.msra.mxu0 0
    %1469 = vmatprep.subr.bf16.mxu0 0
    %1470 = vmatpush1.bf16.msra.mxu0 0
    %1471 = vmatprep.subr.bf16.mxu0 0
    %1472 = vmatpush1.bf16.msra.mxu0 0
    %1473 = vmatprep.subr.bf16.mxu0 0
    %1474 = vmatpush1.bf16.msra.mxu0 0
    %1475 = vmatprep.subr.bf16.mxu0 0
    %1476 = vmatpush1.bf16.msra.mxu0 0
    %1477 = vmatprep.subr.bf16.mxu0 0
    %1478 = vmatpush1.bf16.msra.mxu0 0
    %1479 = vmatprep.subr.bf16.mxu0 0
    %1480 = vmatpush1.bf16.msra.mxu0 0
    %1481 = vmatprep.subr.bf16.mxu0 0
    %1482 = vmatpush1.bf16.msra.mxu0 0
    %1483 = vmatprep.subr.bf16.mxu0 0
    %1484 = vmatpush1.bf16.msra.mxu0 0
    %1485 = vmatprep.subr.bf16.mxu0 0
    %1486 = vmatpush1.bf16.msra.mxu0 0
    %1487 = vmatprep.subr.bf16.mxu0 0
    %1488 = vmatpush1.bf16.msra.mxu0 0
    %1489 = vmatprep.subr.bf16.mxu0 0
    %1490 = vmatpush1.bf16.msra.mxu0 0
    %1491 = vmatprep.mubr.bf16.mxu0 0
    %1492 = vmatmul.mubr.bf16.gmra.mrb[0].mxu0 %v455
    %v1493 = vpop.f32.mrb[0].mxu0
    %v1494 = vadd.f32 0.0, %v1493
    %v1495 = vpop.f32.mrb[0].mxu0
    %v1496 = vpop.f32.mrb[0].mxu0
    %v1497 = vpop.f32.mrb[0].mxu0
    %1498 = vdwg.mxu0
    %v1499 = vmul.f32 %v1494, %v500
    %v1500 = vpack.c.bf16 %v1499, %v1499
    %s1501 = scalar_lea.vmem [#allocation5], 384
    %v1502 = vld [vmem:[%s1501] sm:$0xff]
    %v1503 = vld [vmem:[%s1501 + $0x8] sm:$0xff]
    %v1504 = vld [vmem:[%s1501 + $0x10] sm:$0xff]
    %v1505 = vld [vmem:[%s1501 + $0x18] sm:$0xff]
    %v1506 = vld [vmem:[%s1501 + $0x20] sm:$0xff]
    %v1507 = vld [vmem:[%s1501 + $0x28] sm:$0xff]
    %v1508 = vld [vmem:[%s1501 + $0x30] sm:$0xff]
    %v1509 = vld [vmem:[%s1501 + $0x38] sm:$0xff]
    %v1510 = vld [vmem:[%s1501 + $0x40] sm:$0xff]
    %v1511 = vld [vmem:[%s1501 + $0x48] sm:$0xff]
    %v1512 = vld [vmem:[%s1501 + $0x50] sm:$0xff]
    %v1513 = vld [vmem:[%s1501 + $0x58] sm:$0xff]
    %v1514 = vld [vmem:[%s1501 + $0x60] sm:$0xff]
    %v1515 = vld [vmem:[%s1501 + $0x68] sm:$0xff]
    %v1516 = vld [vmem:[%s1501 + $0x70] sm:$0xff]
    %v1517 = vld [vmem:[%s1501 + $0x78] sm:$0xff]
    %s1518 = scalar_lea.vmem %s6, 3
    %v1519 = vld [vmem:[%s1518] ss:$8 sm:$0x3]
    %v1521 = vlaneseq
    %v1522 = vshrl.u32 %v1521, 7
    %v1523 = vsub.s32 0, %v1522
    %v1524 = vrot.slane %v1519, %v1523
    %v1525 = vlaneseq
    %v1526 = vshrl.u32 %v1525, 7
    %v1527 = vsub.s32 1, %v1526
    %v1528 = vrot.slane %v1519, %v1527
    %v1547 = vunpack.c.l.b16 %v1502
    %v1548 = vunpack.c.h.b16 %v1502
    %v1549 = vunpack.c.l.b16 %v1503
    %v1550 = vunpack.c.h.b16 %v1503
    %v1551 = vunpack.c.l.b16 %v1504
    %v1552 = vunpack.c.h.b16 %v1504
    %v1553 = vunpack.c.l.b16 %v1505
    %v1554 = vunpack.c.h.b16 %v1505
    %v1555 = vunpack.c.l.b16 %v1506
    %v1556 = vunpack.c.h.b16 %v1506
    %v1557 = vunpack.c.l.b16 %v1507
    %v1558 = vunpack.c.h.b16 %v1507
    %v1559 = vunpack.c.l.b16 %v1508
    %v1560 = vunpack.c.h.b16 %v1508
    %v1561 = vunpack.c.l.b16 %v1509
    %v1562 = vunpack.c.h.b16 %v1509
    %v1563 = vunpack.c.l.b16 %v1510
    %v1564 = vunpack.c.h.b16 %v1510
    %v1565 = vunpack.c.l.b16 %v1511
    %v1566 = vunpack.c.h.b16 %v1511
    %v1567 = vunpack.c.l.b16 %v1512
    %v1568 = vunpack.c.h.b16 %v1512
    %v1569 = vunpack.c.l.b16 %v1513
    %v1570 = vunpack.c.h.b16 %v1513
    %v1571 = vunpack.c.l.b16 %v1514
    %v1572 = vunpack.c.h.b16 %v1514
    %v1573 = vunpack.c.l.b16 %v1515
    %v1574 = vunpack.c.h.b16 %v1515
    %v1575 = vunpack.c.l.b16 %v1516
    %v1576 = vunpack.c.h.b16 %v1516
    %v1577 = vunpack.c.l.b16 %v1517
    %v1578 = vunpack.c.h.b16 %v1517
    %v1579 = vpack.c.b16 %v1549, %v1547
    %v1580 = vpack.c.b16 %v1550, %v1548
    %v1581 = vpack.c.b16 %v1553, %v1551
    %v1582 = vpack.c.b16 %v1554, %v1552
    %v1583 = vpack.c.b16 %v1557, %v1555
    %v1584 = vpack.c.b16 %v1558, %v1556
    %v1585 = vpack.c.b16 %v1561, %v1559
    %v1586 = vpack.c.b16 %v1562, %v1560
    %v1587 = vpack.c.b16 %v1565, %v1563
    %v1588 = vpack.c.b16 %v1566, %v1564
    %v1589 = vpack.c.b16 %v1569, %v1567
    %v1590 = vpack.c.b16 %v1570, %v1568
    %v1591 = vpack.c.b16 %v1573, %v1571
    %v1592 = vpack.c.b16 %v1574, %v1572
    %v1593 = vpack.c.b16 %v1577, %v1575
    %v1594 = vpack.c.b16 %v1578, %v1576
    %1611 = vmatprep.subr.bf16.mxu0 %v1580
    %1612 = vmatpush1.bf16.msra.mxu0 %v1579
    %1613 = vmatprep.subr.bf16.mxu0 %v1582
    %1614 = vmatpush1.bf16.msra.mxu0 %v1581
    %1615 = vmatprep.subr.bf16.mxu0 %v1584
    %1616 = vmatpush1.bf16.msra.mxu0 %v1583
    %1617 = vmatprep.subr.bf16.mxu0 %v1586
    %1618 = vmatpush1.bf16.msra.mxu0 %v1585
    %1619 = vmatprep.subr.bf16.mxu0 %v1588
    %1620 = vmatpush1.bf16.msra.mxu0 %v1587
    %1621 = vmatprep.subr.bf16.mxu0 %v1590
    %1622 = vmatpush1.bf16.msra.mxu0 %v1589
    %1623 = vmatprep.subr.bf16.mxu0 %v1592
    %1624 = vmatpush1.bf16.msra.mxu0 %v1591
    %1625 = vmatprep.subr.bf16.mxu0 %v1594
    %1626 = vmatpush1.bf16.msra.mxu0 %v1593
    %1627 = vmatprep.subr.bf16.mxu0 0
    %1628 = vmatpush1.bf16.msra.mxu0 0
    %1629 = vmatprep.subr.bf16.mxu0 0
    %1630 = vmatpush1.bf16.msra.mxu0 0
    %1631 = vmatprep.subr.bf16.mxu0 0
    %1632 = vmatpush1.bf16.msra.mxu0 0
    %1633 = vmatprep.subr.bf16.mxu0 0
    %1634 = vmatpush1.bf16.msra.mxu0 0
    %1635 = vmatprep.subr.bf16.mxu0 0
    %1636 = vmatpush1.bf16.msra.mxu0 0
    %1637 = vmatprep.subr.bf16.mxu0 0
    %1638 = vmatpush1.bf16.msra.mxu0 0
    %1639 = vmatprep.subr.bf16.mxu0 0
    %1640 = vmatpush1.bf16.msra.mxu0 0
    %1641 = vmatprep.subr.bf16.mxu0 0
    %1642 = vmatpush1.bf16.msra.mxu0 0
    %1643 = vmatprep.mubr.bf16.mxu0 0
    %1644 = vmatmul.mubr.bf16.gmra.mrb[0].mxu0 %v1500
    %v1645 = vpop.f32.mrb[0].mxu0
    %v1646 = vadd.f32 %v1524, %v1645
    %v1647 = vpop.f32.mrb[0].mxu0
    %v1648 = vadd.f32 %v1528, %v1647
    %v1649 = vpop.f32.mrb[0].mxu0
    %v1650 = vpop.f32.mrb[0].mxu0
    %1651 = vdwg.mxu0
    %v1652 = vmul.f32 %v1646, 0.01
    %v1653 = vmul.f32 %v1648, 0.01
    %v1654 = vmax.f32 %v1646, %v1652
    %v1655 = vmax.f32 %v1648, %v1653
    %v1656 = vpack.c.bf16 %v1654, %v1654
    %v1657 = vpack.c.bf16 %v1655, %v1655
    %s1658 = scalar_lea.vmem [#allocation7], 384
    %v1659 = vld [vmem:[%s1658] sm:$0xf]
    %v1660 = vld [vmem:[%s1658 + $0x4] sm:$0xf]
    %v1661 = vld [vmem:[%s1658 + $0x8] sm:$0xf]
    %v1662 = vld [vmem:[%s1658 + $0xc] sm:$0xf]
    %v1663 = vld [vmem:[%s1658 + $0x10] sm:$0xf]
    %v1664 = vld [vmem:[%s1658 + $0x14] sm:$0xf]
    %v1665 = vld [vmem:[%s1658 + $0x18] sm:$0xf]
    %v1666 = vld [vmem:[%s1658 + $0x1c] sm:$0xf]
    %v1667 = vld [vmem:[%s1658 + $0x20] sm:$0xf]
    %v1668 = vld [vmem:[%s1658 + $0x24] sm:$0xf]
    %v1669 = vld [vmem:[%s1658 + $0x28] sm:$0xf]
    %v1670 = vld [vmem:[%s1658 + $0x2c] sm:$0xf]
    %v1671 = vld [vmem:[%s1658 + $0x30] sm:$0xf]
    %v1672 = vld [vmem:[%s1658 + $0x34] sm:$0xf]
    %v1673 = vld [vmem:[%s1658 + $0x38] sm:$0xf]
    %v1674 = vld [vmem:[%s1658 + $0x3c] sm:$0xf]
    %v1675 = vld [vmem:[%s1658 + $0x40] sm:$0xf]
    %v1676 = vld [vmem:[%s1658 + $0x44] sm:$0xf]
    %v1677 = vld [vmem:[%s1658 + $0x48] sm:$0xf]
    %v1678 = vld [vmem:[%s1658 + $0x4c] sm:$0xf]
    %v1679 = vld [vmem:[%s1658 + $0x50] sm:$0xf]
    %v1680 = vld [vmem:[%s1658 + $0x54] sm:$0xf]
    %v1681 = vld [vmem:[%s1658 + $0x58] sm:$0xf]
    %v1682 = vld [vmem:[%s1658 + $0x5c] sm:$0xf]
    %v1683 = vld [vmem:[%s1658 + $0x60] sm:$0xf]
    %v1684 = vld [vmem:[%s1658 + $0x64] sm:$0xf]
    %v1685 = vld [vmem:[%s1658 + $0x68] sm:$0xf]
    %v1686 = vld [vmem:[%s1658 + $0x6c] sm:$0xf]
    %v1687 = vld [vmem:[%s1658 + $0x70] sm:$0xf]
    %v1688 = vld [vmem:[%s1658 + $0x74] sm:$0xf]
    %v1689 = vld [vmem:[%s1658 + $0x78] sm:$0xf]
    %v1690 = vld [vmem:[%s1658 + $0x7c] sm:$0xf]
    %v1691 = vld [vmem:[%s8 + $0x4] sm:$0x1]
    %v1692 = vlaneseq
    %v1693 = vshrl.u32 %v1692, 7
    %v1694 = vsub.s32 0, %v1693
    %v1695 = vrot.slane %v1691, %v1694
    %v1728 = vunpack.c.l.b16 %v1659
    %v1729 = vunpack.c.l.b16 %v1660
    %v1730 = vunpack.c.l.b16 %v1661
    %v1731 = vunpack.c.l.b16 %v1662
    %v1732 = vunpack.c.l.b16 %v1663
    %v1733 = vunpack.c.l.b16 %v1664
    %v1734 = vunpack.c.l.b16 %v1665
    %v1735 = vunpack.c.l.b16 %v1666
    %v1736 = vunpack.c.l.b16 %v1667
    %v1737 = vunpack.c.l.b16 %v1668
    %v1738 = vunpack.c.l.b16 %v1669
    %v1739 = vunpack.c.l.b16 %v1670
    %v1740 = vunpack.c.l.b16 %v1671
    %v1741 = vunpack.c.l.b16 %v1672
    %v1742 = vunpack.c.l.b16 %v1673
    %v1743 = vunpack.c.l.b16 %v1674
    %v1744 = vunpack.c.l.b16 %v1675
    %v1745 = vunpack.c.l.b16 %v1676
    %v1746 = vunpack.c.l.b16 %v1677
    %v1747 = vunpack.c.l.b16 %v1678
    %v1748 = vunpack.c.l.b16 %v1679
    %v1749 = vunpack.c.l.b16 %v1680
    %v1750 = vunpack.c.l.b16 %v1681
    %v1751 = vunpack.c.l.b16 %v1682
    %v1752 = vunpack.c.l.b16 %v1683
    %v1753 = vunpack.c.l.b16 %v1684
    %v1754 = vunpack.c.l.b16 %v1685
    %v1755 = vunpack.c.l.b16 %v1686
    %v1756 = vunpack.c.l.b16 %v1687
    %v1757 = vunpack.c.l.b16 %v1688
    %v1758 = vunpack.c.l.b16 %v1689
    %v1759 = vunpack.c.l.b16 %v1690
    %v1760 = vpack.c.b16 %v1729, %v1728
    %v1761 = vpack.c.b16 %v1731, %v1730
    %v1762 = vpack.c.b16 %v1733, %v1732
    %v1763 = vpack.c.b16 %v1735, %v1734
    %v1764 = vpack.c.b16 %v1737, %v1736
    %v1765 = vpack.c.b16 %v1739, %v1738
    %v1766 = vpack.c.b16 %v1741, %v1740
    %v1767 = vpack.c.b16 %v1743, %v1742
    %v1768 = vpack.c.b16 %v1745, %v1744
    %v1769 = vpack.c.b16 %v1747, %v1746
    %v1770 = vpack.c.b16 %v1749, %v1748
    %v1771 = vpack.c.b16 %v1751, %v1750
    %v1772 = vpack.c.b16 %v1753, %v1752
    %v1773 = vpack.c.b16 %v1755, %v1754
    %v1774 = vpack.c.b16 %v1757, %v1756
    %v1775 = vpack.c.b16 %v1759, %v1758
    %1792 = vmatprep.subr.bf16.mxu0 0
    %1793 = vmatpush1.bf16.msra.mxu0 %v1760
    %1794 = vmatprep.subr.bf16.mxu0 0
    %1795 = vmatpush1.bf16.msra.mxu0 %v1761
    %1796 = vmatprep.subr.bf16.mxu0 0
    %1797 = vmatpush1.bf16.msra.mxu0 %v1762
    %1798 = vmatprep.subr.bf16.mxu0 0
    %1799 = vmatpush1.bf16.msra.mxu0 %v1763
    %1800 = vmatprep.subr.bf16.mxu0 0
    %1801 = vmatpush1.bf16.msra.mxu0 %v1764
    %1802 = vmatprep.subr.bf16.mxu0 0
    %1803 = vmatpush1.bf16.msra.mxu0 %v1765
    %1804 = vmatprep.subr.bf16.mxu0 0
    %1805 = vmatpush1.bf16.msra.mxu0 %v1766
    %1806 = vmatprep.subr.bf16.mxu0 0
    %1807 = vmatpush1.bf16.msra.mxu0 %v1767
    %1808 = vmatprep.subr.bf16.mxu0 0
    %1809 = vmatpush1.bf16.msra.mxu0 %v1768
    %1810 = vmatprep.subr.bf16.mxu0 0
    %1811 = vmatpush1.bf16.msra.mxu0 %v1769
    %1812 = vmatprep.subr.bf16.mxu0 0
    %1813 = vmatpush1.bf16.msra.mxu0 %v1770
    %1814 = vmatprep.subr.bf16.mxu0 0
    %1815 = vmatpush1.bf16.msra.mxu0 %v1771
    %1816 = vmatprep.subr.bf16.mxu0 0
    %1817 = vmatpush1.bf16.msra.mxu0 %v1772
    %1818 = vmatprep.subr.bf16.mxu0 0
    %1819 = vmatpush1.bf16.msra.mxu0 %v1773
    %1820 = vmatprep.subr.bf16.mxu0 0
    %1821 = vmatpush1.bf16.msra.mxu0 %v1774
    %1822 = vmatprep.subr.bf16.mxu0 0
    %1823 = vmatpush1.bf16.msra.mxu0 %v1775
    %1824 = vmatprep.mubr.bf16.mxu0 %v1657
    %1825 = vmatmul.mubr.bf16.gmra.mrb[0].mxu0 %v1656
    %v1826 = vpop.f32.mrb[0].mxu0
    %v1827 = vadd.f32 %v1695, %v1826
    %v1828 = vpop.f32.mrb[0].mxu0
    %v1829 = vpop.f32.mrb[0].mxu0
    %v1830 = vpop.f32.mrb[0].mxu0
    %1831 = vdwg.mxu0
    %v1832 = vmul.f32 %v1827, 0.01
    %v1833 = vmax.f32 %v1827, %v1832
    %v1834 = vpack.c.bf16 %v1833, %v1833
    %s1835 = scalar_lea.vmem [#allocation10], 64
    %v1836 = vld [vmem:[%s1835] sm:$0xf]
    %v1837 = vld [vmem:[%s1835 + $0x4] sm:$0xf]
    %v1838 = vld [vmem:[%s1835 + $0x8] sm:$0xf]
    %v1839 = vld [vmem:[%s1835 + $0xc] sm:$0xf]
    %v1840 = vld [vmem:[%s1835 + $0x10] sm:$0xf]
    %v1841 = vld [vmem:[%s1835 + $0x14] sm:$0xf]
    %v1842 = vld [vmem:[%s1835 + $0x18] sm:$0xf]
    %v1843 = vld [vmem:[%s1835 + $0x1c] sm:$0xf]
    %v1844 = vld [vmem:[%s1835 + $0x20] sm:$0xf]
    %v1845 = vld [vmem:[%s1835 + $0x24] sm:$0xf]
    %v1846 = vld [vmem:[%s1835 + $0x28] sm:$0xf]
    %v1847 = vld [vmem:[%s1835 + $0x2c] sm:$0xf]
    %v1848 = vld [vmem:[%s1835 + $0x30] sm:$0xf]
    %v1849 = vld [vmem:[%s1835 + $0x34] sm:$0xf]
    %v1850 = vld [vmem:[%s1835 + $0x38] sm:$0xf]
    %v1851 = vld [vmem:[%s1835 + $0x3c] sm:$0xf]
    %v1868 = vunpack.c.l.b16 %v1836
    %v1869 = vunpack.c.l.b16 %v1837
    %v1870 = vunpack.c.l.b16 %v1838
    %v1871 = vunpack.c.l.b16 %v1839
    %v1872 = vunpack.c.l.b16 %v1840
    %v1873 = vunpack.c.l.b16 %v1841
    %v1874 = vunpack.c.l.b16 %v1842
    %v1875 = vunpack.c.l.b16 %v1843
    %v1876 = vunpack.c.l.b16 %v1844
    %v1877 = vunpack.c.l.b16 %v1845
    %v1878 = vunpack.c.l.b16 %v1846
    %v1879 = vunpack.c.l.b16 %v1847
    %v1880 = vunpack.c.l.b16 %v1848
    %v1881 = vunpack.c.l.b16 %v1849
    %v1882 = vunpack.c.l.b16 %v1850
    %v1883 = vunpack.c.l.b16 %v1851
    %v1884 = vpack.c.b16 %v1869, %v1868
    %v1885 = vpack.c.b16 %v1871, %v1870
    %v1886 = vpack.c.b16 %v1873, %v1872
    %v1887 = vpack.c.b16 %v1875, %v1874
    %v1888 = vpack.c.b16 %v1877, %v1876
    %v1889 = vpack.c.b16 %v1879, %v1878
    %v1890 = vpack.c.b16 %v1881, %v1880
    %v1891 = vpack.c.b16 %v1883, %v1882
    %1900 = vmatprep.subr.bf16.mxu0 0
    %1901 = vmatpush1.bf16.msra.mxu0 %v1884
    %1902 = vmatprep.subr.bf16.mxu0 0
    %1903 = vmatpush1.bf16.msra.mxu0 %v1885
    %1904 = vmatprep.subr.bf16.mxu0 0
    %1905 = vmatpush1.bf16.msra.mxu0 %v1886
    %1906 = vmatprep.subr.bf16.mxu0 0
    %1907 = vmatpush1.bf16.msra.mxu0 %v1887
    %1908 = vmatprep.subr.bf16.mxu0 0
    %1909 = vmatpush1.bf16.msra.mxu0 %v1888
    %1910 = vmatprep.subr.bf16.mxu0 0
    %1911 = vmatpush1.bf16.msra.mxu0 %v1889
    %1912 = vmatprep.subr.bf16.mxu0 0
    %1913 = vmatpush1.bf16.msra.mxu0 %v1890
    %1914 = vmatprep.subr.bf16.mxu0 0
    %1915 = vmatpush1.bf16.msra.mxu0 %v1891
    %1916 = vmatprep.subr.bf16.mxu0 0
    %1917 = vmatpush1.bf16.msra.mxu0 0
    %1918 = vmatprep.subr.bf16.mxu0 0
    %1919 = vmatpush1.bf16.msra.mxu0 0
    %1920 = vmatprep.subr.bf16.mxu0 0
    %1921 = vmatpush1.bf16.msra.mxu0 0
    %1922 = vmatprep.subr.bf16.mxu0 0
    %1923 = vmatpush1.bf16.msra.mxu0 0
    %1924 = vmatprep.subr.bf16.mxu0 0
    %1925 = vmatpush1.bf16.msra.mxu0 0
    %1926 = vmatprep.subr.bf16.mxu0 0
    %1927 = vmatpush1.bf16.msra.mxu0 0
    %1928 = vmatprep.subr.bf16.mxu0 0
    %1929 = vmatpush1.bf16.msra.mxu0 0
    %1930 = vmatprep.subr.bf16.mxu0 0
    %1931 = vmatpush1.bf16.msra.mxu0 0
    %1932 = vmatprep.mubr.bf16.mxu0 0
    %1933 = vmatmul.mubr.bf16.gmra.mrb[0].mxu0 %v1834
    %v1934 = vpop.f32.mrb[0].mxu0
    %v1935 = vadd.f32 0.0, %v1934
    %v1936 = vpop.f32.mrb[0].mxu0
    %v1937 = vpop.f32.mrb[0].mxu0
    %v1938 = vpop.f32.mrb[0].mxu0
    %1939 = vdwg.mxu0
    %v1940 = vpack.c.bf16 %v1935, %v1935
    %v1942 = vsel %vm952, %v1940, 0
    %1944 = vmatprep.subr.bf16.mxu0 0
    %1945 = vmatpush1.bf16.msra.mxu0 %v1942
    %1946 = vmatprep.subr.bf16.mxu0 0
    %1947 = vmatpush1.bf16.msra.mxu0 0
    %1948 = vmatprep.subr.bf16.mxu0 0
    %1949 = vmatpush1.bf16.msra.mxu0 0
    %1950 = vmatprep.subr.bf16.mxu0 0
    %1951 = vmatpush1.bf16.msra.mxu0 0
    %1952 = vmatprep.subr.bf16.mxu0 0
    %1953 = vmatpush1.bf16.msra.mxu0 0
    %1954 = vmatprep.subr.bf16.mxu0 0
    %1955 = vmatpush1.bf16.msra.mxu0 0
    %1956 = vmatprep.subr.bf16.mxu0 0
    %1957 = vmatpush1.bf16.msra.mxu0 0
    %1958 = vmatprep.subr.bf16.mxu0 0
    %1959 = vmatpush1.bf16.msra.mxu0 0
    %1960 = vmatprep.subr.bf16.mxu0 0
    %1961 = vmatpush1.bf16.msra.mxu0 0
    %1962 = vmatprep.subr.bf16.mxu0 0
    %1963 = vmatpush1.bf16.msra.mxu0 0
    %1964 = vmatprep.subr.bf16.mxu0 0
    %1965 = vmatpush1.bf16.msra.mxu0 0
    %1966 = vmatprep.subr.bf16.mxu0 0
    %1967 = vmatpush1.bf16.msra.mxu0 0
    %1968 = vmatprep.subr.bf16.mxu0 0
    %1969 = vmatpush1.bf16.msra.mxu0 0
    %1970 = vmatprep.subr.bf16.mxu0 0
    %1971 = vmatpush1.bf16.msra.mxu0 0
    %1972 = vmatprep.subr.bf16.mxu0 0
    %1973 = vmatpush1.bf16.msra.mxu0 0
    %1974 = vmatprep.subr.bf16.mxu0 0
    %1975 = vmatpush1.bf16.msra.mxu0 0
    %1976 = vmatprep.mubr.bf16.mxu0 0
    %1977 = vmatmul.mubr.bf16.gmra.mrb[0].mxu0 %v950
    %v1978 = vpop.f32.mrb[0].mxu0
    %v1979 = vadd.f32 0.0, %v1978
    %v1980 = vpop.f32.mrb[0].mxu0
    %v1981 = vpop.f32.mrb[0].mxu0
    %v1982 = vadd.f32 0.0, %v1981
    %v1983 = vpop.f32.mrb[0].mxu0
    %1984 = vdwg.mxu0
    %s1985 = scalar_lea.vmem [#allocation8], 64
    %v1986 = vld [vmem:[%s1985] sm:$0xf]
    %v1987 = vld [vmem:[%s1985 + $0x4] sm:$0xf]
    %v1988 = vld [vmem:[%s1985 + $0x8] sm:$0xf]
    %v1989 = vld [vmem:[%s1985 + $0xc] sm:$0xf]
    %v1990 = vld [vmem:[%s1985 + $0x10] sm:$0xf]
    %v1991 = vld [vmem:[%s1985 + $0x14] sm:$0xf]
    %v1992 = vld [vmem:[%s1985 + $0x18] sm:$0xf]
    %v1993 = vld [vmem:[%s1985 + $0x1c] sm:$0xf]
    %v1994 = vld [vmem:[%s1985 + $0x20] sm:$0xf]
    %v1995 = vld [vmem:[%s1985 + $0x24] sm:$0xf]
    %v1996 = vld [vmem:[%s1985 + $0x28] sm:$0xf]
    %v1997 = vld [vmem:[%s1985 + $0x2c] sm:$0xf]
    %v1998 = vld [vmem:[%s1985 + $0x30] sm:$0xf]
    %v1999 = vld [vmem:[%s1985 + $0x34] sm:$0xf]
    %v2000 = vld [vmem:[%s1985 + $0x38] sm:$0xf]
    %v2001 = vld [vmem:[%s1985 + $0x3c] sm:$0xf]
    %v2018 = vunpack.c.l.b16 %v1986
    %v2019 = vunpack.c.l.b16 %v1987
    %v2020 = vunpack.c.l.b16 %v1988
    %v2021 = vunpack.c.l.b16 %v1989
    %v2022 = vunpack.c.l.b16 %v1990
    %v2023 = vunpack.c.l.b16 %v1991
    %v2024 = vunpack.c.l.b16 %v1992
    %v2025 = vunpack.c.l.b16 %v1993
    %v2026 = vunpack.c.l.b16 %v1994
    %v2027 = vunpack.c.l.b16 %v1995
    %v2028 = vunpack.c.l.b16 %v1996
    %v2029 = vunpack.c.l.b16 %v1997
    %v2030 = vunpack.c.l.b16 %v1998
    %v2031 = vunpack.c.l.b16 %v1999
    %v2032 = vunpack.c.l.b16 %v2000
    %v2033 = vunpack.c.l.b16 %v2001
    %v2034 = vpack.c.b16 %v2019, %v2018
    %v2035 = vpack.c.b16 %v2021, %v2020
    %v2036 = vpack.c.b16 %v2023, %v2022
    %v2037 = vpack.c.b16 %v2025, %v2024
    %v2038 = vpack.c.b16 %v2027, %v2026
    %v2039 = vpack.c.b16 %v2029, %v2028
    %v2040 = vpack.c.b16 %v2031, %v2030
    %v2041 = vpack.c.b16 %v2033, %v2032
    %2050 = vmatprep.subr.bf16.mxu0 0
    %2051 = vmatpush1.bf16.msra.mxu0 %v2034
    %2052 = vmatprep.subr.bf16.mxu0 0
    %2053 = vmatpush1.bf16.msra.mxu0 %v2035
    %2054 = vmatprep.subr.bf16.mxu0 0
    %2055 = vmatpush1.bf16.msra.mxu0 %v2036
    %2056 = vmatprep.subr.bf16.mxu0 0
    %2057 = vmatpush1.bf16.msra.mxu0 %v2037
    %2058 = vmatprep.subr.bf16.mxu0 0
    %2059 = vmatpush1.bf16.msra.mxu0 %v2038
    %2060 = vmatprep.subr.bf16.mxu0 0
    %2061 = vmatpush1.bf16.msra.mxu0 %v2039
    %2062 = vmatprep.subr.bf16.mxu0 0
    %2063 = vmatpush1.bf16.msra.mxu0 %v2040
    %2064 = vmatprep.subr.bf16.mxu0 0
    %2065 = vmatpush1.bf16.msra.mxu0 %v2041
    %2066 = vmatprep.subr.bf16.mxu0 0
    %2067 = vmatpush1.bf16.msra.mxu0 0
    %2068 = vmatprep.subr.bf16.mxu0 0
    %2069 = vmatpush1.bf16.msra.mxu0 0
    %2070 = vmatprep.subr.bf16.mxu0 0
    %2071 = vmatpush1.bf16.msra.mxu0 0
    %2072 = vmatprep.subr.bf16.mxu0 0
    %2073 = vmatpush1.bf16.msra.mxu0 0
    %2074 = vmatprep.subr.bf16.mxu0 0
    %2075 = vmatpush1.bf16.msra.mxu0 0
    %2076 = vmatprep.subr.bf16.mxu0 0
    %2077 = vmatpush1.bf16.msra.mxu0 0
    %2078 = vmatprep.subr.bf16.mxu0 0
    %2079 = vmatpush1.bf16.msra.mxu0 0
    %2080 = vmatprep.subr.bf16.mxu0 0
    %2081 = vmatpush1.bf16.msra.mxu0 0
    %2082 = vmatprep.mubr.bf16.mxu0 0
    %2083 = vmatmul.mubr.bf16.gmra.mrb[0].mxu0 %v1458
    %v2084 = vpop.f32.mrb[0].mxu0
    %v2085 = vadd.f32 %v1979, %v2084
    %v2086 = vpop.f32.mrb[0].mxu0
    %v2087 = vpop.f32.mrb[0].mxu0
    %v2088 = vadd.f32 %v1982, %v2087
    %v2089 = vpop.f32.mrb[0].mxu0
    %2090 = vdwg.mxu0
    %v2091 = vld [vmem:[%s8 + $0x5] sm:$0x1]
    %v2092 = vlaneseq
    %v2093 = vshrl.u32 %v2092, 7
    %v2094 = vsub.s32 0, %v2093
    %v2095 = vrot.slane %v2091, %v2094
    %v2096 = vadd.f32 %v2085, %v2095
    %v2097 = vadd.f32 %v2088, %v2095
    %v2098 = vmul.f32 %v2096, 0.01
    %v2099 = vmul.f32 %v2097, 0.01
    %v2100 = vmax.f32 %v2096, %v2098
    %v2101 = vmax.f32 %v2097, %v2099
    %v2102 = vadd.f32 %v2100, %v1113
    %v2103 = vadd.f32 %v2101, %v1114
    %v2104 = vpack.c.bf16 %v2103, %v2102
    %2105 = vmatprep.subr.bf16.mxu0 0
    %2106 = vmatpush1.bf16.msra.mxu0 %v2104
    %2107 = vmatprep.subr.bf16.mxu0 0
    %2108 = vmatpush1.bf16.msra.mxu0 0
    %2109 = vmatprep.subr.bf16.mxu0 0
    %2110 = vmatpush1.bf16.msra.mxu0 0
    %2111 = vmatprep.subr.bf16.mxu0 0
    %2112 = vmatpush1.bf16.msra.mxu0 0
    %2113 = vmatprep.subr.bf16.mxu0 0
    %2114 = vmatpush1.bf16.msra.mxu0 0
    %2115 = vmatprep.subr.bf16.mxu0 0
    %2116 = vmatpush1.bf16.msra.mxu0 0
    %2117 = vmatprep.subr.bf16.mxu0 0
    %2118 = vmatpush1.bf16.msra.mxu0 0
    %2119 = vmatprep.subr.bf16.mxu0 0
    %2120 = vmatpush1.bf16.msra.mxu0 0
    %2121 = vmatprep.subr.bf16.mxu0 0
    %2122 = vmatpush1.bf16.msra.mxu0 0
    %2123 = vmatprep.subr.bf16.mxu0 0
    %2124 = vmatpush1.bf16.msra.mxu0 0
    %2125 = vmatprep.subr.bf16.mxu0 0
    %2126 = vmatpush1.bf16.msra.mxu0 0
    %2127 = vmatprep.subr.bf16.mxu0 0
    %2128 = vmatpush1.bf16.msra.mxu0 0
    %2129 = vmatprep.subr.bf16.mxu0 0
    %2130 = vmatpush1.bf16.msra.mxu0 0
    %2131 = vmatprep.subr.bf16.mxu0 0
    %2132 = vmatpush1.bf16.msra.mxu0 0
    %2133 = vmatprep.subr.bf16.mxu0 0
    %2134 = vmatpush1.bf16.msra.mxu0 0
    %2135 = vmatprep.subr.bf16.mxu0 0
    %2136 = vmatpush1.bf16.msra.mxu0 0
    %2137 = vmatprep.mubr.bf16.mxu0 0
    %2138 = vmatmul.mubr.bf16.gmra.mrb[0].mxu0 %v455
    %v2139 = vpop.f32.mrb[0].mxu0
    %v2140 = vadd.f32 0.0, %v2139
    %v2141 = vpop.f32.mrb[0].mxu0
    %v2142 = vpop.f32.mrb[0].mxu0
    %v2143 = vpop.f32.mrb[0].mxu0
    %2144 = vdwg.mxu0
    %v2145 = vmul.f32 %v2140, %v500
    %v2146 = vpack.c.bf16 %v2145, %v2145
    %s2147 = scalar_lea.vmem [#allocation5], 512
    %v2148 = vld [vmem:[%s2147] sm:$0xff]
    %v2149 = vld [vmem:[%s2147 + $0x8] sm:$0xff]
    %v2150 = vld [vmem:[%s2147 + $0x10] sm:$0xff]
    %v2151 = vld [vmem:[%s2147 + $0x18] sm:$0xff]
    %v2152 = vld [vmem:[%s2147 + $0x20] sm:$0xff]
    %v2153 = vld [vmem:[%s2147 + $0x28] sm:$0xff]
    %v2154 = vld [vmem:[%s2147 + $0x30] sm:$0xff]
    %v2155 = vld [vmem:[%s2147 + $0x38] sm:$0xff]
    %v2156 = vld [vmem:[%s2147 + $0x40] sm:$0xff]
    %v2157 = vld [vmem:[%s2147 + $0x48] sm:$0xff]
    %v2158 = vld [vmem:[%s2147 + $0x50] sm:$0xff]
    %v2159 = vld [vmem:[%s2147 + $0x58] sm:$0xff]
    %v2160 = vld [vmem:[%s2147 + $0x60] sm:$0xff]
    %v2161 = vld [vmem:[%s2147 + $0x68] sm:$0xff]
    %v2162 = vld [vmem:[%s2147 + $0x70] sm:$0xff]
    %v2163 = vld [vmem:[%s2147 + $0x78] sm:$0xff]
    %s2164 = scalar_lea.vmem %s6, 4
    %v2165 = vld [vmem:[%s2164] ss:$8 sm:$0x3]
    %v2167 = vlaneseq
    %v2168 = vshrl.u32 %v2167, 7
    %v2169 = vsub.s32 0, %v2168
    %v2170 = vrot.slane %v2165, %v2169
    %v2171 = vlaneseq
    %v2172 = vshrl.u32 %v2171, 7
    %v2173 = vsub.s32 1, %v2172
    %v2174 = vrot.slane %v2165, %v2173
    %v2193 = vunpack.c.l.b16 %v2148
    %v2194 = vunpack.c.h.b16 %v2148
    %v2195 = vunpack.c.l.b16 %v2149
    %v2196 = vunpack.c.h.b16 %v2149
    %v2197 = vunpack.c.l.b16 %v2150
    %v2198 = vunpack.c.h.b16 %v2150
    %v2199 = vunpack.c.l.b16 %v2151
    %v2200 = vunpack.c.h.b16 %v2151
    %v2201 = vunpack.c.l.b16 %v2152
    %v2202 = vunpack.c.h.b16 %v2152
    %v2203 = vunpack.c.l.b16 %v2153
    %v2204 = vunpack.c.h.b16 %v2153
    %v2205 = vunpack.c.l.b16 %v2154
    %v2206 = vunpack.c.h.b16 %v2154
    %v2207 = vunpack.c.l.b16 %v2155
    %v2208 = vunpack.c.h.b16 %v2155
    %v2209 = vunpack.c.l.b16 %v2156
    %v2210 = vunpack.c.h.b16 %v2156
    %v2211 = vunpack.c.l.b16 %v2157
    %v2212 = vunpack.c.h.b16 %v2157
    %v2213 = vunpack.c.l.b16 %v2158
    %v2214 = vunpack.c.h.b16 %v2158
    %v2215 = vunpack.c.l.b16 %v2159
    %v2216 = vunpack.c.h.b16 %v2159
    %v2217 = vunpack.c.l.b16 %v2160
    %v2218 = vunpack.c.h.b16 %v2160
    %v2219 = vunpack.c.l.b16 %v2161
    %v2220 = vunpack.c.h.b16 %v2161
    %v2221 = vunpack.c.l.b16 %v2162
    %v2222 = vunpack.c.h.b16 %v2162
    %v2223 = vunpack.c.l.b16 %v2163
    %v2224 = vunpack.c.h.b16 %v2163
    %v2225 = vpack.c.b16 %v2195, %v2193
    %v2226 = vpack.c.b16 %v2196, %v2194
    %v2227 = vpack.c.b16 %v2199, %v2197
    %v2228 = vpack.c.b16 %v2200, %v2198
    %v2229 = vpack.c.b16 %v2203, %v2201
    %v2230 = vpack.c.b16 %v2204, %v2202
    %v2231 = vpack.c.b16 %v2207, %v2205
    %v2232 = vpack.c.b16 %v2208, %v2206
    %v2233 = vpack.c.b16 %v2211, %v2209
    %v2234 = vpack.c.b16 %v2212, %v2210
    %v2235 = vpack.c.b16 %v2215, %v2213
    %v2236 = vpack.c.b16 %v2216, %v2214
    %v2237 = vpack.c.b16 %v2219, %v2217
    %v2238 = vpack.c.b16 %v2220, %v2218
    %v2239 = vpack.c.b16 %v2223, %v2221
    %v2240 = vpack.c.b16 %v2224, %v2222
    %2257 = vmatprep.subr.bf16.mxu0 %v2226
    %2258 = vmatpush1.bf16.msra.mxu0 %v2225
    %2259 = vmatprep.subr.bf16.mxu0 %v2228
    %2260 = vmatpush1.bf16.msra.mxu0 %v2227
    %2261 = vmatprep.subr.bf16.mxu0 %v2230
    %2262 = vmatpush1.bf16.msra.mxu0 %v2229
    %2263 = vmatprep.subr.bf16.mxu0 %v2232
    %2264 = vmatpush1.bf16.msra.mxu0 %v2231
    %2265 = vmatprep.subr.bf16.mxu0 %v2234
    %2266 = vmatpush1.bf16.msra.mxu0 %v2233
    %2267 = vmatprep.subr.bf16.mxu0 %v2236
    %2268 = vmatpush1.bf16.msra.mxu0 %v2235
    %2269 = vmatprep.subr.bf16.mxu0 %v2238
    %2270 = vmatpush1.bf16.msra.mxu0 %v2237
    %2271 = vmatprep.subr.bf16.mxu0 %v2240
    %2272 = vmatpush1.bf16.msra.mxu0 %v2239
    %2273 = vmatprep.subr.bf16.mxu0 0
    %2274 = vmatpush1.bf16.msra.mxu0 0
    %2275 = vmatprep.subr.bf16.mxu0 0
    %2276 = vmatpush1.bf16.msra.mxu0 0
    %2277 = vmatprep.subr.bf16.mxu0 0
    %2278 = vmatpush1.bf16.msra.mxu0 0
    %2279 = vmatprep.subr.bf16.mxu0 0
    %2280 = vmatpush1.bf16.msra.mxu0 0
    %2281 = vmatprep.subr.bf16.mxu0 0
    %2282 = vmatpush1.bf16.msra.mxu0 0
    %2283 = vmatprep.subr.bf16.mxu0 0
    %2284 = vmatpush1.bf16.msra.mxu0 0
    %2285 = vmatprep.subr.bf16.mxu0 0
    %2286 = vmatpush1.bf16.msra.mxu0 0
    %2287 = vmatprep.subr.bf16.mxu0 0
    %2288 = vmatpush1.bf16.msra.mxu0 0
    %2289 = vmatprep.mubr.bf16.mxu0 0
    %2290 = vmatmul.mubr.bf16.gmra.mrb[0].mxu0 %v2146
    %v2291 = vpop.f32.mrb[0].mxu0
    %v2292 = vadd.f32 %v2170, %v2291
    %v2293 = vpop.f32.mrb[0].mxu0
    %v2294 = vadd.f32 %v2174, %v2293
    %v2295 = vpop.f32.mrb[0].mxu0
    %v2296 = vpop.f32.mrb[0].mxu0
    %2297 = vdwg.mxu0
    %v2298 = vmul.f32 %v2292, 0.01
    %v2299 = vmul.f32 %v2294, 0.01
    %v2300 = vmax.f32 %v2292, %v2298
    %v2301 = vmax.f32 %v2294, %v2299
    %v2302 = vpack.c.bf16 %v2300, %v2300
    %v2303 = vpack.c.bf16 %v2301, %v2301
    %s2304 = scalar_lea.vmem [#allocation7], 512
    %v2305 = vld [vmem:[%s2304] sm:$0xf]
    %v2306 = vld [vmem:[%s2304 + $0x4] sm:$0xf]
    %v2307 = vld [vmem:[%s2304 + $0x8] sm:$0xf]
    %v2308 = vld [vmem:[%s2304 + $0xc] sm:$0xf]
    %v2309 = vld [vmem:[%s2304 + $0x10] sm:$0xf]
    %v2310 = vld [vmem:[%s2304 + $0x14] sm:$0xf]
    %v2311 = vld [vmem:[%s2304 + $0x18] sm:$0xf]
    %v2312 = vld [vmem:[%s2304 + $0x1c] sm:$0xf]
    %v2313 = vld [vmem:[%s2304 + $0x20] sm:$0xf]
    %v2314 = vld [vmem:[%s2304 + $0x24] sm:$0xf]
    %v2315 = vld [vmem:[%s2304 + $0x28] sm:$0xf]
    %v2316 = vld [vmem:[%s2304 + $0x2c] sm:$0xf]
    %v2317 = vld [vmem:[%s2304 + $0x30] sm:$0xf]
    %v2318 = vld [vmem:[%s2304 + $0x34] sm:$0xf]
    %v2319 = vld [vmem:[%s2304 + $0x38] sm:$0xf]
    %v2320 = vld [vmem:[%s2304 + $0x3c] sm:$0xf]
    %v2321 = vld [vmem:[%s2304 + $0x40] sm:$0xf]
    %v2322 = vld [vmem:[%s2304 + $0x44] sm:$0xf]
    %v2323 = vld [vmem:[%s2304 + $0x48] sm:$0xf]
    %v2324 = vld [vmem:[%s2304 + $0x4c] sm:$0xf]
    %v2325 = vld [vmem:[%s2304 + $0x50] sm:$0xf]
    %v2326 = vld [vmem:[%s2304 + $0x54] sm:$0xf]
    %v2327 = vld [vmem:[%s2304 + $0x58] sm:$0xf]
    %v2328 = vld [vmem:[%s2304 + $0x5c] sm:$0xf]
    %v2329 = vld [vmem:[%s2304 + $0x60] sm:$0xf]
    %v2330 = vld [vmem:[%s2304 + $0x64] sm:$0xf]
    %v2331 = vld [vmem:[%s2304 + $0x68] sm:$0xf]
    %v2332 = vld [vmem:[%s2304 + $0x6c] sm:$0xf]
    %v2333 = vld [vmem:[%s2304 + $0x70] sm:$0xf]
    %v2334 = vld [vmem:[%s2304 + $0x74] sm:$0xf]
    %v2335 = vld [vmem:[%s2304 + $0x78] sm:$0xf]
    %v2336 = vld [vmem:[%s2304 + $0x7c] sm:$0xf]
    %v2337 = vld [vmem:[%s8 + $0x6] sm:$0x1]
    %v2338 = vlaneseq
    %v2339 = vshrl.u32 %v2338, 7
    %v2340 = vsub.s32 0, %v2339
    %v2341 = vrot.slane %v2337, %v2340
    %v2374 = vunpack.c.l.b16 %v2305
    %v2375 = vunpack.c.l.b16 %v2306
    %v2376 = vunpack.c.l.b16 %v2307
    %v2377 = vunpack.c.l.b16 %v2308
    %v2378 = vunpack.c.l.b16 %v2309
    %v2379 = vunpack.c.l.b16 %v2310
    %v2380 = vunpack.c.l.b16 %v2311
    %v2381 = vunpack.c.l.b16 %v2312
    %v2382 = vunpack.c.l.b16 %v2313
    %v2383 = vunpack.c.l.b16 %v2314
    %v2384 = vunpack.c.l.b16 %v2315
    %v2385 = vunpack.c.l.b16 %v2316
    %v2386 = vunpack.c.l.b16 %v2317
    %v2387 = vunpack.c.l.b16 %v2318
    %v2388 = vunpack.c.l.b16 %v2319
    %v2389 = vunpack.c.l.b16 %v2320
    %v2390 = vunpack.c.l.b16 %v2321
    %v2391 = vunpack.c.l.b16 %v2322
    %v2392 = vunpack.c.l.b16 %v2323
    %v2393 = vunpack.c.l.b16 %v2324
    %v2394 = vunpack.c.l.b16 %v2325
    %v2395 = vunpack.c.l.b16 %v2326
    %v2396 = vunpack.c.l.b16 %v2327
    %v2397 = vunpack.c.l.b16 %v2328
    %v2398 = vunpack.c.l.b16 %v2329
    %v2399 = vunpack.c.l.b16 %v2330
    %v2400 = vunpack.c.l.b16 %v2331
    %v2401 = vunpack.c.l.b16 %v2332
    %v2402 = vunpack.c.l.b16 %v2333
    %v2403 = vunpack.c.l.b16 %v2334
    %v2404 = vunpack.c.l.b16 %v2335
    %v2405 = vunpack.c.l.b16 %v2336
    %v2406 = vpack.c.b16 %v2375, %v2374
    %v2407 = vpack.c.b16 %v2377, %v2376
    %v2408 = vpack.c.b16 %v2379, %v2378
    %v2409 = vpack.c.b16 %v2381, %v2380
    %v2410 = vpack.c.b16 %v2383, %v2382
    %v2411 = vpack.c.b16 %v2385, %v2384
    %v2412 = vpack.c.b16 %v2387, %v2386
    %v2413 = vpack.c.b16 %v2389, %v2388
    %v2414 = vpack.c.b16 %v2391, %v2390
    %v2415 = vpack.c.b16 %v2393, %v2392
    %v2416 = vpack.c.b16 %v2395, %v2394
    %v2417 = vpack.c.b16 %v2397, %v2396
    %v2418 = vpack.c.b16 %v2399, %v2398
    %v2419 = vpack.c.b16 %v2401, %v2400
    %v2420 = vpack.c.b16 %v2403, %v2402
    %v2421 = vpack.c.b16 %v2405, %v2404
    %2438 = vmatprep.subr.bf16.mxu0 0
    %2439 = vmatpush1.bf16.msra.mxu0 %v2406
    %2440 = vmatprep.subr.bf16.mxu0 0
    %2441 = vmatpush1.bf16.msra.mxu0 %v2407
    %2442 = vmatprep.subr.bf16.mxu0 0
    %2443 = vmatpush1.bf16.msra.mxu0 %v2408
    %2444 = vmatprep.subr.bf16.mxu0 0
    %2445 = vmatpush1.bf16.msra.mxu0 %v2409
    %2446 = vmatprep.subr.bf16.mxu0 0
    %2447 = vmatpush1.bf16.msra.mxu0 %v2410
    %2448 = vmatprep.subr.bf16.mxu0 0
    %2449 = vmatpush1.bf16.msra.mxu0 %v2411
    %2450 = vmatprep.subr.bf16.mxu0 0
    %2451 = vmatpush1.bf16.msra.mxu0 %v2412
    %2452 = vmatprep.subr.bf16.mxu0 0
    %2453 = vmatpush1.bf16.msra.mxu0 %v2413
    %2454 = vmatprep.subr.bf16.mxu0 0
    %2455 = vmatpush1.bf16.msra.mxu0 %v2414
    %2456 = vmatprep.subr.bf16.mxu0 0
    %2457 = vmatpush1.bf16.msra.mxu0 %v2415
    %2458 = vmatprep.subr.bf16.mxu0 0
    %2459 = vmatpush1.bf16.msra.mxu0 %v2416
    %2460 = vmatprep.subr.bf16.mxu0 0
    %2461 = vmatpush1.bf16.msra.mxu0 %v2417
    %2462 = vmatprep.subr.bf16.mxu0 0
    %2463 = vmatpush1.bf16.msra.mxu0 %v2418
    %2464 = vmatprep.subr.bf16.mxu0 0
    %2465 = vmatpush1.bf16.msra.mxu0 %v2419
    %2466 = vmatprep.subr.bf16.mxu0 0
    %2467 = vmatpush1.bf16.msra.mxu0 %v2420
    %2468 = vmatprep.subr.bf16.mxu0 0
    %2469 = vmatpush1.bf16.msra.mxu0 %v2421
    %2470 = vmatprep.mubr.bf16.mxu0 %v2303
    %2471 = vmatmul.mubr.bf16.gmra.mrb[0].mxu0 %v2302
    %v2472 = vpop.f32.mrb[0].mxu0
    %v2473 = vadd.f32 %v2341, %v2472
    %v2474 = vpop.f32.mrb[0].mxu0
    %v2475 = vpop.f32.mrb[0].mxu0
    %v2476 = vpop.f32.mrb[0].mxu0
    %2477 = vdwg.mxu0
    %v2478 = vmul.f32 %v2473, 0.01
    %v2479 = vmax.f32 %v2473, %v2478
    %v2480 = vld [vmem:[%s4] sm:$0xff]
    %2482 = vset.pattern.permute.xlu0 0
    %2483 = vperm.xlu0 %2482, %v2480
    %v2484 = vpop.permute.xlu0 %2483
    %v2486 = vadd.f32 %v2479, %v2484
    %2487 = vst [vmem:[#allocation11] sm:$0xff] %v2486
    // Predicated region
    $region66: #{tpu_custom_call.1} parent=1 // pred_check
      _
    $region67: #{tpu_custom_call.1} parent=1 // pred_check_branch
      %2489 = sbr.rel (0) target = $region69
    $region68: #{tpu_custom_call.1} parent=1 // pred_region
      %s2491 = ssub.s32 128, 128
      %2492 = vsyncadd [#allocation4], %s2491
      %s2494 = sshll.u32 [#allocation11], 4
      %s2495 = int_to_ptr.vmem [resolvable:$true] %s2494
      %2497 = dma.vmem_to_hbm [thread:$0]  %s2495, 128, %s11, [#allocation4]
    $region69: #{tpu_custom_call.1} parent=1 // pred_fallthru
      _
    // Predicated region
    $region70: #{tpu_custom_call.1} parent=1 // pred_check
      _
    $region71: #{tpu_custom_call.1} parent=1 // pred_check_branch
      %2499 = sbr.rel (0) target = $region73
    $region72: #{tpu_custom_call.1} parent=1 // pred_region
      %2500 = dma.done [#allocation4], 128
    $region73: #{tpu_custom_call.1} parent=1 // pred_fallthru
      _
    %2501 = vsyncpa [#allocation3], 1
    %2502 = vsyncpa [#allocation6], 1
    %2503 = vsyncpa [#allocation9], 1
    %2504 = vsyncpa [#allocation4], 1

</llo_original>
